<compile_context>
chip_gen: v5e
topology: v5e:2x2
jax: 0.10.0
libtpu: 0.0.40
codegen_flags: <defaults>
</compile_context>

<pallas_src>
import numpy as np
import jax
import jax.numpy as jnp
from jax import lax
from jax.experimental import pallas as pl
from jax.experimental.pallas import tpu as pltpu


def _round_up(x, m):
    return ((x + m - 1) // m) * m


# ----------------------------------------------------------------------------
# Fused kernel: encoder K-reduction over the grid + image head in the epilogue.
# ----------------------------------------------------------------------------
def fused_clip_kernel(alpha_ref,                # SMEM (1,) f32
                      x_ref, w_ref,             # streamed bf16 tiles
                      txtT_ref,                 # resident [D, N_pad] f32 (pre-normalized, pre-scaled, pre-transposed)
                      wi1_ref, wi2_ref,         # image adapter weights f32
                      out_ref,                  # [B_pad, N_pad] f32 logits
                      acc_ref):                 # VMEM [B_pad, D] f32 accumulator
    k = pl.program_id(0)

    @pl.when(k == 0)
    def _():
        acc_ref[...] = jnp.zeros_like(acc_ref)

    # Stand-in image encoder: bf16 tiles streamed from HBM, f32 MXU accumulation.
    acc_ref[...] += jnp.dot(x_ref[...], w_ref[...],
                            preferred_element_type=jnp.float32)

    @pl.when(k == pl.num_programs(0) - 1)
    def _():
        alpha = alpha_ref[0]
        img = acc_ref[...]                                      # [B_pad, D] f32

        # Image adapter: ReLU(ReLU(x @ W1) @ W2)  (Linear layers, bias=False)
        hi = jnp.maximum(jnp.dot(img, wi1_ref[...],
                                 preferred_element_type=jnp.float32), 0.0)
        ai = jnp.maximum(jnp.dot(hi, wi2_ref[...],
                                 preferred_element_type=jnp.float32), 0.0)
        img_f = alpha * ai + (1.0 - alpha) * img

        # L2 normalize along features.  Padded (all-zero) batch rows are
        # guarded so they yield zeros instead of NaN; real rows match the
        # reference x / x.norm() exactly.
        ss = jnp.sum(img_f * img_f, axis=-1, keepdims=True)
        inv = jnp.where(ss > 0.0, lax.rsqrt(ss), 0.0)
        img_n = img_f * inv

        # logits = exp(logit_scale) * img_n @ txt_n.T.  The scale and the
        # transpose are already folded into the precomputed txtT, so this is a
        # plain [B_pad, D] x [D, N_pad] matmul (no in-kernel transpose).
        out_ref[...] = jnp.dot(img_n, txtT_ref[...],
                               preferred_element_type=jnp.float32)


# ----------------------------------------------------------------------------
# One-time preparation (hoisted out of the per-call forward):
#   * pad + bf16-cast of the encoder weight
#   * the whole image-independent text branch, pre-transposed and pre-scaled
# Re-run only when the parameters change.
# ----------------------------------------------------------------------------
def prepare_state(params, *, in_dim, tk_max=8192):
    D = params["w_visual"].shape[1]
    N = params["class_features"].shape[0]
    H = params["w_img1"].shape[1]
    K = in_dim

    K128 = _round_up(K, 128)
    tk = min(tk_max, K128)              # K tile, multiple of 128
    K_pad = _round_up(K, tk)
    num_k = K_pad // tk                 # == 1 for small encoders (demo path)
    N_pad = _round_up(N, 128)           # lane-dense output -> unmasked stores

    # Encoder weight: padded bf16, built once (not per forward call).
    w_p = jnp.zeros((K_pad, D), jnp.bfloat16)
    w_p = w_p.at[:K, :].set(params["w_visual"].astype(jnp.bfloat16))

    # Text branch (image independent): adapter, beta mix, L2 norm, with
    # exp(logit_scale) folded in, transposed to a [D, N_pad] RHS.
    txt = params["class_features"].astype(jnp.float32)
    beta = params["beta"][0]
    at = jax.nn.relu(jnp.dot(jax.nn.relu(jnp.dot(txt, params["w_txt1"])),
                             params["w_txt2"]))
    txt_f = beta * at + (1.0 - beta) * txt
    txt_n = txt_f / jnp.linalg.norm(txt_f, axis=-1, keepdims=True)
    txt_n = jnp.exp(params["logit_scale"][0]) * txt_n
    txt_nT = jnp.zeros((D, N_pad), jnp.float32)
    txt_nT = txt_nT.at[:, :N].set(txt_n.T)

    return {
        "w_p": w_p, "txt_nT": txt_nT,
        "wi1": params["w_img1"].astype(jnp.float32),
        "wi2": params["w_img2"].astype(jnp.float32),
        "alpha": params["alpha"].astype(jnp.float32),
        "K": K, "K_pad": K_pad, "tk": tk, "num_k": num_k,
        "D": D, "H": H, "N": N, "N_pad": N_pad,
    }


# ----------------------------------------------------------------------------
# CustomCLIP forward (inference path, training=False)
# ----------------------------------------------------------------------------
def custom_clip_forward(image, state):
    B = image.shape[0]
    K, K_pad, tk, num_k = state["K"], state["K_pad"], state["tk"], state["num_k"]
    D, H, N, N_pad = state["D"], state["H"], state["N"], state["N_pad"]

    # bf16 packs 16 rows per sublane group -> pad batch to 16 for the x tile.
    B_pad = _round_up(max(B, 1), 16)

    # Per-call input padding (image is the only per-call tensor).
    # NOTE: bf16 streaming of x / w_visual is a deliberate deviation from the
    # fp32 PyTorch reference; accumulation stays f32 on the MXU.
    x = image.reshape(B, -1).astype(jnp.bfloat16)
    x_p = jnp.zeros((B_pad, K_pad), jnp.bfloat16)
    x_p = x_p.at[:B, :K].set(x)

    # VMEM budget: double-buffered x/w tiles + (double-buffered) constants +
    # accumulator + output.  Cap at 48 MiB so it also fits v7x's 64 MiB VMEM.
    vmem_bytes = (2 * B_pad * tk * 2 + 2 * tk * D * 2
                  + 2 * D * N_pad * 4 + 4 * D * H * 4
                  + B_pad * D * 4 + 2 * B_pad * N_pad * 4)
    vmem_limit = int(min(max(vmem_bytes + (8 << 20), 32 << 20), 48 << 20))

    smem = pl.BlockSpec(memory_space=pltpu.MemorySpace.SMEM)

    logits_pad = pl.pallas_call(
        fused_clip_kernel,
        out_shape=jax.ShapeDtypeStruct((B_pad, N_pad), jnp.float32),
        grid_spec=pltpu.PrefetchScalarGridSpec(
            num_scalar_prefetch=0,
            grid=(num_k,),
            in_specs=[
                smem,                                           # alpha
                pl.BlockSpec((B_pad, tk), lambda k: (0, k)),    # x tiles (streamed)
                pl.BlockSpec((tk, D), lambda k: (k, 0)),        # w_visual tiles (streamed)
                pl.BlockSpec((D, N_pad), lambda k: (0, 0)),     # precomputed text RHS
                pl.BlockSpec((D, H), lambda k: (0, 0)),         # adapter_image.W1
                pl.BlockSpec((H, D), lambda k: (0, 0)),         # adapter_image.W2
            ],
            out_specs=pl.BlockSpec((B_pad, N_pad), lambda k: (0, 0)),
            scratch_shapes=[pltpu.VMEM((B_pad, D), jnp.float32)],   # encoder acc
        ),
        compiler_params=pltpu.CompilerParams(
            dimension_semantics=("arbitrary",),                 # K is a reduction axis
            vmem_limit_bytes=vmem_limit),
    )(state["alpha"], x_p, state["w_p"], state["txt_nT"],
      state["wi1"], state["wi2"])

    return logits_pad[:B, :N]


# ----------------------------------------------------------------------------
# Parameter init (matches module: embed_dim=512, Adapter reduction=4,
# alpha=0.2, beta=0.0, logit_scale=ln(1/0.07))
# ----------------------------------------------------------------------------
def init_params(key, *, in_dim, embed_dim=512, reduction=4, n_classes=16):
    k = jax.random.split(key, 6)
    hid = embed_dim // reduction
    scale = 0.02
    return {
        # TODO(synk): stand-in for the pretrained CLIP ViT visual encoder.
        "w_visual": scale * jax.random.normal(k[0], (in_dim, embed_dim), jnp.float32),
        # frozen class (text) features, as produced by clip_model.encode_text
        "class_features": jax.random.normal(k[1], (n_classes, embed_dim), jnp.float32),
        # Adapter weights stored as [in, out] (transposed vs nn.Linear's [out, in])
        "w_img1": scale * jax.random.normal(k[2], (embed_dim, hid), jnp.float32),
        "w_img2": scale * jax.random.normal(k[3], (hid, embed_dim), jnp.float32),
        "w_txt1": scale * jax.random.normal(k[4], (embed_dim, hid), jnp.float32),
        "w_txt2": scale * jax.random.normal(k[5], (hid, embed_dim), jnp.float32),
        "alpha": jnp.array([0.2], jnp.float32),
        "beta": jnp.array([0.0], jnp.float32),
        "logit_scale": jnp.array([np.log(1.0 / 0.07)], jnp.float32),
    }


# Pure-JAX reference (same bf16 encoder inputs, f32 accumulation) for a sanity check.
def _reference_forward(image, params):
    B = image.shape[0]
    x = image.reshape(B, -1).astype(jnp.bfloat16)
    w = params["w_visual"].astype(jnp.bfloat16)
    img = jnp.dot(x, w, preferred_element_type=jnp.float32)
    alpha = params["alpha"][0]
    beta = params["beta"][0]
    ai = jax.nn.relu(jnp.dot(jax.nn.relu(jnp.dot(img, params["w_img1"])),
                             params["w_img2"]))
    img_f = alpha * ai + (1.0 - alpha) * img
    txt = params["class_features"]
    at = jax.nn.relu(jnp.dot(jax.nn.relu(jnp.dot(txt, params["w_txt1"])),
                             params["w_txt2"]))
    txt_f = beta * at + (1.0 - beta) * txt
    img_f = img_f / jnp.linalg.norm(img_f, axis=-1, keepdims=True)
    txt_f = txt_f / jnp.linalg.norm(txt_f, axis=-1, keepdims=True)
    return jnp.exp(params["logit_scale"][0]) * img_f @ txt_f.T


if __name__ == "__main__":
    key = jax.random.PRNGKey(0)
    k_img, k_par = jax.random.split(key)

    # Small, module-consistent shapes: batch=2, NCHW image [2, 3, 16, 16],
    # embed_dim=512 (fixed by the module), reduction=4 -> hidden 128, 16 classes.
    B, C, H, W = 2, 3, 16, 16
    n_classes = 16
    image = jax.random.normal(k_img, (B, C, H, W), jnp.float32)

    params = init_params(k_par, in_dim=C * H * W, embed_dim=512,
                         reduction=4, n_classes=n_classes)
    state = prepare_state(params, in_dim=C * H * W)   # one-time weight/text prep

    logits = custom_clip_forward(image, state)
    logits = jax.block_until_ready(logits)

    assert logits.shape == (B, n_classes)
    assert bool(jnp.all(jnp.isfinite(logits)))

    ref = jax.block_until_ready(_reference_forward(image, params))
    assert np.allclose(np.asarray(logits), np.asarray(ref), rtol=5e-2, atol=5e-2)

    print("KERNEL_OK")
</pallas_src>

<mosaic_0001>
module attributes {stable_mosaic.version = 11 : i64} {
  func.func @fused_clip_kernel(%arg0: i32, %arg1: memref<1xf32, #tpu.memory_space<smem>>, %arg2: memref<16x768xbf16, #tpu.memory_space<vmem>>, %arg3: memref<768x512xbf16, #tpu.memory_space<vmem>>, %arg4: memref<512x128xf32, #tpu.memory_space<vmem>>, %arg5: memref<512x128xf32, #tpu.memory_space<vmem>>, %arg6: memref<128x512xf32, #tpu.memory_space<vmem>>, %arg7: memref<16x128xf32, #tpu.memory_space<vmem>>, %arg8: memref<16x512xf32, #tpu.memory_space<vmem>>) attributes {dimension_semantics = [#tpu.dimension_semantics<arbitrary>], iteration_bounds = array<i64: 1>, scalar_prefetch = 0 : i64, scratch_operands = 1 : i64, tpu.core_type = #tpu.core_type<tc>, window_params = [{transform_indices = @transform_0, window_bounds = array<i64: 1>}, {transform_indices = @transform_1, window_bounds = array<i64: 16, 768>}, {transform_indices = @transform_2, window_bounds = array<i64: 768, 512>}, {pipeline_mode = #tpu.pipeline_mode<synchronous>, transform_indices = @transform_3, window_bounds = array<i64: 512, 128>}, {pipeline_mode = #tpu.pipeline_mode<synchronous>, transform_indices = @transform_4, window_bounds = array<i64: 512, 128>}, {pipeline_mode = #tpu.pipeline_mode<synchronous>, transform_indices = @transform_5, window_bounds = array<i64: 128, 512>}, {pipeline_mode = #tpu.pipeline_mode<synchronous>, transform_indices = @transform_6, window_bounds = array<i64: 16, 128>}]} {
    %c0_i32 = arith.constant 0 : i32
    %0 = arith.cmpi eq, %arg0, %c0_i32 : i32
    %1 = arith.extui %0 : i1 to i32
    %c0_i32_0 = arith.constant 0 : i32
    %2 = arith.cmpi ne, %1, %c0_i32_0 : i32
    scf.if %2 {
      %cst_10 = arith.constant 0.000000e+00 : f32
      %12 = vector.broadcast %cst_10 : f32 to vector<16x512xf32>
      %c0_11 = arith.constant 0 : index
      %c0_12 = arith.constant 0 : index
      %13 = vector.load %arg8[%c0_11, %c0_12] : memref<16x512xf32, #tpu.memory_space<vmem>>, vector<16x512xf32>
      tpu.vector_store %arg8[%c0_11, %c0_12], %12 {strides = array<i32>} : memref<16x512xf32, #tpu.memory_space<vmem>>, vector<16x512xf32>,
    } else {
    }
    %c0 = arith.constant 0 : index
    %c0_1 = arith.constant 0 : index
    %3 = vector.load %arg8[%c0, %c0_1] : memref<16x512xf32, #tpu.memory_space<vmem>>, vector<16x512xf32>
    %c0_2 = arith.constant 0 : index
    %c0_3 = arith.constant 0 : index
    %4 = vector.load %arg2[%c0_2, %c0_3] : memref<16x768xbf16, #tpu.memory_space<vmem>>, vector<16x768xbf16>
    %c0_4 = arith.constant 0 : index
    %c0_5 = arith.constant 0 : index
    %5 = vector.load %arg3[%c0_4, %c0_5] : memref<768x512xbf16, #tpu.memory_space<vmem>>, vector<768x512xbf16>
    %cst = arith.constant dense<0.000000e+00> : vector<16x512xf32>
    %6 = tpu.matmul %4, %5, %cst {dimension_numbers = #tpu.dot_dimension_numbers<[1], [0], [0], [1], [0, 0, 1, 1], [], []>} : vector<16x768xbf16>, vector<768x512xbf16>, vector<16x512xf32> -> vector<16x512xf32>
    %7 = arith.addf %3, %6 : vector<16x512xf32>
    %c0_6 = arith.constant 0 : index
    %c0_7 = arith.constant 0 : index
    %8 = vector.load %arg8[%c0_6, %c0_7] : memref<16x512xf32, #tpu.memory_space<vmem>>, vector<16x512xf32>
    tpu.vector_store %arg8[%c0_6, %c0_7], %7 {strides = array<i32>} : memref<16x512xf32, #tpu.memory_space<vmem>>, vector<16x512xf32>,
    %c0_i32_8 = arith.constant 0 : i32
    %9 = arith.cmpi eq, %arg0, %c0_i32_8 : i32
    %10 = arith.extui %9 : i1 to i32
    %c0_i32_9 = arith.constant 0 : i32
    %11 = arith.cmpi ne, %10, %c0_i32_9 : i32
    scf.if %11 {
      %c0_10 = arith.constant 0 : index
      %12 = memref.load %arg1[%c0_10] : memref<1xf32, #tpu.memory_space<smem>>
      %c0_11 = arith.constant 0 : index
      %c0_12 = arith.constant 0 : index
      %13 = vector.load %arg8[%c0_11, %c0_12] : memref<16x512xf32, #tpu.memory_space<vmem>>, vector<16x512xf32>
      %c0_13 = arith.constant 0 : index
      %c0_14 = arith.constant 0 : index
      %14 = vector.load %arg5[%c0_13, %c0_14] : memref<512x128xf32, #tpu.memory_space<vmem>>, vector<512x128xf32>
      %cst_15 = arith.constant dense<0.000000e+00> : vector<16x128xf32>
      %15 = tpu.matmul %13, %14, %cst_15 {dimension_numbers = #tpu.dot_dimension_numbers<[1], [0], [0], [1], [0, 0, 1, 1], [], []>} : vector<16x512xf32>, vector<512x128xf32>, vector<16x128xf32> -> vector<16x128xf32>
      %cst_16 = arith.constant 0.000000e+00 : f32
      %16 = vector.broadcast %cst_16 : f32 to vector<16x128xf32>
      %17 = arith.maximumf %15, %16 : vector<16x128xf32>
      %c0_17 = arith.constant 0 : index
      %c0_18 = arith.constant 0 : index
      %18 = vector.load %arg6[%c0_17, %c0_18] : memref<128x512xf32, #tpu.memory_space<vmem>>, vector<128x512xf32>
      %cst_19 = arith.constant dense<0.000000e+00> : vector<16x512xf32>
      %19 = tpu.matmul %17, %18, %cst_19 {dimension_numbers = #tpu.dot_dimension_numbers<[1], [0], [0], [1], [0, 0, 1, 1], [], []>} : vector<16x128xf32>, vector<128x512xf32>, vector<16x512xf32> -> vector<16x512xf32>
      %cst_20 = arith.constant 0.000000e+00 : f32
      %20 = vector.broadcast %cst_20 : f32 to vector<16x512xf32>
      %21 = arith.maximumf %19, %20 : vector<16x512xf32>
      %22 = vector.broadcast %12 : f32 to vector<16x512xf32>
      %23 = arith.mulf %22, %21 : vector<16x512xf32>
      %cst_21 = arith.constant 1.000000e+00 : f32
      %24 = arith.subf %cst_21, %12 : f32
      %25 = vector.broadcast %24 : f32 to vector<16x512xf32>
      %26 = arith.mulf %25, %13 : vector<16x512xf32>
      %27 = arith.addf %23, %26 : vector<16x512xf32>
      %28 = arith.mulf %27, %27 : vector<16x512xf32>
      %cst_22 = arith.constant dense<0.000000e+00> : vector<16xf32>
      %29 = vector.multi_reduction <add>, %28, %cst_22 [1] : vector<16x512xf32> to vector<16xf32>
      %30 = vector.shape_cast %29 : vector<16xf32> to vector<16x1xf32>
      %cst_23 = arith.constant 0.000000e+00 : f32
      %31 = vector.broadcast %cst_23 : f32 to vector<16x1xf32>
      %32 = arith.cmpf ogt, %30, %31 : vector<16x1xf32>
      %33 = math.rsqrt %30 : vector<16x1xf32>
      %cst_24 = arith.constant 0.000000e+00 : f32
      %34 = vector.broadcast %cst_24 : f32 to vector<16x1xf32>
      %35 = arith.select %32, %33, %34 : vector<16x1xi1>, vector<16x1xf32>
      %36 = vector.broadcast %35 : vector<16x1xf32> to vector<16x512xf32>
      %37 = arith.mulf %27, %36 : vector<16x512xf32>
      %c0_25 = arith.constant 0 : index
      %c0_26 = arith.constant 0 : index
      %38 = vector.load %arg4[%c0_25, %c0_26] : memref<512x128xf32, #tpu.memory_space<vmem>>, vector<512x128xf32>
      %cst_27 = arith.constant dense<0.000000e+00> : vector<16x128xf32>
      %39 = tpu.matmul %37, %38, %cst_27 {dimension_numbers = #tpu.dot_dimension_numbers<[1], [0], [0], [1], [0, 0, 1, 1], [], []>} : vector<16x512xf32>, vector<512x128xf32>, vector<16x128xf32> -> vector<16x128xf32>
      %c0_28 = arith.constant 0 : index
      %c0_29 = arith.constant 0 : index
      %40 = vector.load %arg7[%c0_28, %c0_29] : memref<16x128xf32, #tpu.memory_space<vmem>>, vector<16x128xf32>
      tpu.vector_store %arg7[%c0_28, %c0_29], %39 {strides = array<i32>} : memref<16x128xf32, #tpu.memory_space<vmem>>, vector<16x128xf32>,
    } else {
    }
    return
  }
  func.func @transform_0(%arg0: i32) -> i32 {
    %c0_i32 = arith.constant 0 : i32
    %c0_i32_0 = arith.constant 0 : i32
    return %c0_i32 : i32
  }
  func.func @transform_1(%arg0: i32) -> (i32, i32) {
    %c0_i32 = arith.constant 0 : i32
    %c0_i32_0 = arith.constant 0 : i32
    return %c0_i32, %arg0 : i32, i32
  }
  func.func @transform_2(%arg0: i32) -> (i32, i32) {
    %c0_i32 = arith.constant 0 : i32
    %c0_i32_0 = arith.constant 0 : i32
    return %arg0, %c0_i32 : i32, i32
  }
  func.func @transform_3(%arg0: i32) -> (i32, i32) {
    %c0_i32 = arith.constant 0 : i32
    %c0_i32_0 = arith.constant 0 : i32
    %c0_i32_1 = arith.constant 0 : i32
    return %c0_i32, %c0_i32_0 : i32, i32
  }
  func.func @transform_4(%arg0: i32) -> (i32, i32) {
    %c0_i32 = arith.constant 0 : i32
    %c0_i32_0 = arith.constant 0 : i32
    %c0_i32_1 = arith.constant 0 : i32
    return %c0_i32, %c0_i32_0 : i32, i32
  }
  func.func @transform_5(%arg0: i32) -> (i32, i32) {
    %c0_i32 = arith.constant 0 : i32
    %c0_i32_0 = arith.constant 0 : i32
    %c0_i32_1 = arith.constant 0 : i32
    return %c0_i32, %c0_i32_0 : i32, i32
  }
  func.func @transform_6(%arg0: i32) -> (i32, i32) {
    %c0_i32 = arith.constant 0 : i32
    %c0_i32_0 = arith.constant 0 : i32
    %c0_i32_1 = arith.constant 0 : i32
    return %c0_i32, %c0_i32_0 : i32, i32
  }
}

</mosaic_0001>

<llo_original>
// kernel: tpu_custom_call.1
$region0: #{tpu_custom_call.1}
  #allocation0 [shape = 'u32[]', space=smem, size = 0x4, offset = 0x4, fixed_abs, tag = 'smem constant byte address 0x4 - core index']
  #allocation1 [shape = 'u32[72,128]{1,0:T(1,128)}', space=vmem, size = 0x9000, scoped, tag = 'internal scratch']
  #allocation2 [shape = 'f32[16,512]{1,0:T(8,128)}', space=vmem, size = 0x8000, scoped, tag = 'scratch operand']
  #allocation3 [shape = 'f32[1]{0:T(128)S(6)}', space=smem, size = 0x200, scoped, tag = 'scoped memory for tpu_custom_call.1']
  %s0 = inlined_call_operand.<no memory space> [shape: f32[1], index: 0, kind: input, shape index: {}]
  %s1 = inlined_call_operand.hbm [shape: bf16[16,768], index: 1, kind: input, shape index: {}]
  %s2 = inlined_call_operand.hbm [shape: bf16[768,512], index: 2, kind: input, shape index: {}]
  %s3 = inlined_call_operand.hbm [shape: f32[512,128], index: 3, kind: input, shape index: {}]
  %s4 = inlined_call_operand.hbm [shape: f32[512,128], index: 4, kind: input, shape index: {}]
  %s5 = inlined_call_operand.hbm [shape: f32[128,512], index: 5, kind: input, shape index: {}]
  %s6 = inlined_call_operand.hbm [shape: f32[16,128], index: 6, kind: output, shape index: {}]
  %s7 = sld [smem:[#allocation0]]
  $region62: #{tpu_custom_call.1} parent=0
    _
  %s9 = ssub.s32 1, %s7
  %s10 = scalar_select 0, %s9, %s7
  %11 = sst [smem:[#allocation3]] %s0
  $region1: #{tpu_custom_call.1} parent=0
    #allocation4 [shape = 'u8[24576]{0}', space=vmem, size = 0x6000, scoped, tag = 'input window, operand 1, single buffered']
    #allocation5 [shape = 's32[1]{0}', space=sflag, size = 0x4, scoped, tag = 'scoped memory for tpu_custom_call.1']
    #allocation6 [shape = 's32[1]{0}', space=sflag, size = 0x4, scoped, tag = 'scoped memory for tpu_custom_call.1']
    #allocation7 [shape = 'u8[786432]{0}', space=vmem, size = 0xc0000, scoped, tag = 'input window, operand 2, single buffered']
    #allocation8 [shape = 's32[1]{0}', space=sflag, size = 0x4, scoped, tag = 'scoped memory for tpu_custom_call.1']
    #allocation9 [shape = 'u8[262144]{0}', space=vmem, size = 0x40000, scoped, tag = 'input window, operand 3, single buffered']
    #allocation10 [shape = 'u8[262144]{0}', space=vmem, size = 0x40000, scoped, tag = 'input window, operand 4, single buffered']
    #allocation11 [shape = 's32[1]{0}', space=sflag, size = 0x4, scoped, tag = 'scoped memory for tpu_custom_call.1']
    #allocation12 [shape = 'u8[262144]{0}', space=vmem, size = 0x40000, scoped, tag = 'input window, operand 5, single buffered']
    #allocation13 [shape = 'u8[8192]{0}', space=vmem, size = 0x2000, scoped, tag = 'output window, operand 0, single buffered']
    %12 = vsyncpa [#allocation5], 0
    %13 = vsyncpa [#allocation8], 0
    %14 = vsyncpa [#allocation11], 0
    %15 = vsyncpa [#allocation6], 0
    // Predicated region
    $region2: #{tpu_custom_call.1} parent=1 // pred_check
      _
    $region3: #{tpu_custom_call.1} parent=1 // pred_check_branch
      %17 = sbr.rel (0) target = $region5
    $region4: #{tpu_custom_call.1} parent=1 // pred_region
      _
    $region5: #{tpu_custom_call.1} parent=1 // pred_fallthru
      _
    // Predicated region
    $region6: #{tpu_custom_call.1} parent=1 // pred_check
      _
    $region7: #{tpu_custom_call.1} parent=1 // pred_check_branch
      %19 = sbr.rel (0) target = $region9
    $region8: #{tpu_custom_call.1} parent=1 // pred_region
      %21 = vsyncadd [#allocation5], 0
      %s22 = sshll.u32 %s1, 4
      %s23 = int_to_ptr.hbm [resolvable:$true] %s22
      %s24 = sshll.u32 [#allocation4], 4
      %s25 = int_to_ptr.vmem [resolvable:$true] %s24
      %30 = dma.hbm_to_vmem [thread:$0]  %s23, 768, %s25, [#allocation5], 384, 384, 24
    $region9: #{tpu_custom_call.1} parent=1 // pred_fallthru
      _
    // Predicated region
    $region10: #{tpu_custom_call.1} parent=1 // pred_check
      _
    $region11: #{tpu_custom_call.1} parent=1 // pred_check_branch
      %32 = sbr.rel (0) target = $region13
    $region12: #{tpu_custom_call.1} parent=1 // pred_region
      %34 = vsyncadd [#allocation8], 0
      %s35 = sshll.u32 %s2, 4
      %s36 = int_to_ptr.hbm [resolvable:$true] %s35
      %s37 = sshll.u32 [#allocation7], 4
      %s38 = int_to_ptr.vmem [resolvable:$true] %s37
      %43 = dma.hbm_to_vmem [thread:$0]  %s36, 24576, %s38, [#allocation8], 256, 256, 16
    $region13: #{tpu_custom_call.1} parent=1 // pred_fallthru
      _
    // Predicated region
    $region14: #{tpu_custom_call.1} parent=1 // pred_check
      _
    $region15: #{tpu_custom_call.1} parent=1 // pred_check_branch
      %45 = sbr.rel (0) target = $region17
    $region16: #{tpu_custom_call.1} parent=1 // pred_region
      %47 = vsyncadd [#allocation8], 0
      %s48 = sshll.u32 %s3, 4
      %s49 = int_to_ptr.hbm [resolvable:$true] %s48
      %s50 = sshll.u32 [#allocation9], 4
      %s51 = int_to_ptr.vmem [resolvable:$true] %s50
      %56 = dma.hbm_to_vmem [thread:$0]  %s49, 8192, %s51, [#allocation8], 128, 128, 8
    $region17: #{tpu_custom_call.1} parent=1 // pred_fallthru
      _
    // Predicated region
    $region18: #{tpu_custom_call.1} parent=1 // pred_check
      _
    $region19: #{tpu_custom_call.1} parent=1 // pred_check_branch
      %58 = sbr.rel (0) target = $region21
    $region20: #{tpu_custom_call.1} parent=1 // pred_region
      %60 = vsyncadd [#allocation11], 0
      %s61 = sshll.u32 %s4, 4
      %s62 = int_to_ptr.hbm [resolvable:$true] %s61
      %s63 = sshll.u32 [#allocation10], 4
      %s64 = int_to_ptr.vmem [resolvable:$true] %s63
      %69 = dma.hbm_to_vmem [thread:$0]  %s62, 8192, %s64, [#allocation11], 128, 128, 8
    $region21: #{tpu_custom_call.1} parent=1 // pred_fallthru
      _
    // Predicated region
    $region22: #{tpu_custom_call.1} parent=1 // pred_check
      _
    $region23: #{tpu_custom_call.1} parent=1 // pred_check_branch
      %71 = sbr.rel (0) target = $region25
    $region24: #{tpu_custom_call.1} parent=1 // pred_region
      %73 = vsyncadd [#allocation11], 0
      %s74 = sshll.u32 %s5, 4
      %s75 = int_to_ptr.hbm [resolvable:$true] %s74
      %s76 = sshll.u32 [#allocation12], 4
      %s77 = int_to_ptr.vmem [resolvable:$true] %s76
      %82 = dma.hbm_to_vmem [thread:$0]  %s75, 8192, %s77, [#allocation11], 512, 512, 32
    $region25: #{tpu_custom_call.1} parent=1 // pred_fallthru
      _
    // Predicated region
    $region26: #{tpu_custom_call.1} parent=1 // pred_check
      _
    $region27: #{tpu_custom_call.1} parent=1 // pred_check_branch
      %84 = sbr.rel (0) target = $region29
    $region28: #{tpu_custom_call.1} parent=1 // pred_region
      %86 = dma.done [#allocation5], 768
    $region29: #{tpu_custom_call.1} parent=1 // pred_fallthru
      _
    // Predicated region
    $region30: #{tpu_custom_call.1} parent=1 // pred_check
      _
    $region31: #{tpu_custom_call.1} parent=1 // pred_check_branch
      %88 = sbr.rel (0) target = $region33
    $region32: #{tpu_custom_call.1} parent=1 // pred_region
      %90 = dma.done [#allocation8], 24576
    $region33: #{tpu_custom_call.1} parent=1 // pred_fallthru
      _
    // Predicated region
    $region34: #{tpu_custom_call.1} parent=1 // pred_check
      _
    $region35: #{tpu_custom_call.1} parent=1 // pred_check_branch
      %92 = sbr.rel (0) target = $region37
    $region36: #{tpu_custom_call.1} parent=1 // pred_region
      %94 = dma.done [#allocation8], 8192
    $region37: #{tpu_custom_call.1} parent=1 // pred_fallthru
      _
    // Predicated region
    $region38: #{tpu_custom_call.1} parent=1 // pred_check
      _
    $region39: #{tpu_custom_call.1} parent=1 // pred_check_branch
      %96 = sbr.rel (0) target = $region41
    $region40: #{tpu_custom_call.1} parent=1 // pred_region
      %98 = dma.done [#allocation11], 8192
    $region41: #{tpu_custom_call.1} parent=1 // pred_fallthru
      _
    // Predicated region
    $region42: #{tpu_custom_call.1} parent=1 // pred_check
      _
    $region43: #{tpu_custom_call.1} parent=1 // pred_check_branch
      %100 = sbr.rel (0) target = $region45
    $region44: #{tpu_custom_call.1} parent=1 // pred_region
      %102 = dma.done [#allocation11], 8192
    $region45: #{tpu_custom_call.1} parent=1 // pred_fallthru
      _
    %p103 = scmp.eq.s32.totalorder 0, 0
    // Predicated region
    $region46: #{tpu_custom_call.1} parent=1 // pred_check
      %p104 = pneg %p103
    $region47: #{tpu_custom_call.1} parent=1 // pred_check_branch
      %106 = sbr.rel (%p104) target = $region49
    $region48: #{tpu_custom_call.1} parent=1 // pred_region
      %107 = vst [vmem:[#allocation2] sm:$0xff] 0.0
      %108 = vst [vmem:[#allocation2 + $0x8] sm:$0xff] 0.0
      %109 = vst [vmem:[#allocation2 + $0x10] sm:$0xff] 0.0
      %110 = vst [vmem:[#allocation2 + $0x18] sm:$0xff] 0.0
      %111 = vst [vmem:[#allocation2 + $0x20] sm:$0xff] 0.0
      %112 = vst [vmem:[#allocation2 + $0x28] sm:$0xff] 0.0
      %113 = vst [vmem:[#allocation2 + $0x30] sm:$0xff] 0.0
      %114 = vst [vmem:[#allocation2 + $0x38] sm:$0xff] 0.0
    $region49: #{tpu_custom_call.1} parent=1 // pred_fallthru
      _
    %v115 = vld [vmem:[#allocation2] sm:$0xff]
    %v116 = vld [vmem:[#allocation2 + $0x8] sm:$0xff]
    %v117 = vld [vmem:[#allocation2 + $0x10] sm:$0xff]
    %v118 = vld [vmem:[#allocation2 + $0x18] sm:$0xff]
    %v119 = vld [vmem:[#allocation2 + $0x20] sm:$0xff]
    %v120 = vld [vmem:[#allocation2 + $0x28] sm:$0xff]
    %v121 = vld [vmem:[#allocation2 + $0x30] sm:$0xff]
    %v122 = vld [vmem:[#allocation2 + $0x38] sm:$0xff]
    %v123 = vld [vmem:[#allocation4] sm:$0xff]
    %v124 = vld [vmem:[#allocation4 + $0x8] sm:$0xff]
    %v125 = vld [vmem:[#allocation4 + $0x10] sm:$0xff]
    %v126 = vld [vmem:[#allocation4 + $0x18] sm:$0xff]
    %v127 = vld [vmem:[#allocation4 + $0x20] sm:$0xff]
    %v128 = vld [vmem:[#allocation4 + $0x28] sm:$0xff]
    %v129 = vld [vmem:[#allocation7] sm:$0xff]
    %v130 = vld [vmem:[#allocation7 + $0x8] sm:$0xff]
    %v131 = vld [vmem:[#allocation7 + $0x10] sm:$0xff]
    %v132 = vld [vmem:[#allocation7 + $0x18] sm:$0xff]
    %v133 = vld [vmem:[#allocation7 + $0x20] sm:$0xff]
    %v134 = vld [vmem:[#allocation7 + $0x28] sm:$0xff]
    %v135 = vld [vmem:[#allocation7 + $0x30] sm:$0xff]
    %v136 = vld [vmem:[#allocation7 + $0x38] sm:$0xff]
    %v137 = vld [vmem:[#allocation7 + $0x40] sm:$0xff]
    %v138 = vld [vmem:[#allocation7 + $0x48] sm:$0xff]
    %v139 = vld [vmem:[#allocation7 + $0x50] sm:$0xff]
    %v140 = vld [vmem:[#allocation7 + $0x58] sm:$0xff]
    %v141 = vld [vmem:[#allocation7 + $0x60] sm:$0xff]
    %v142 = vld [vmem:[#allocation7 + $0x68] sm:$0xff]
    %v143 = vld [vmem:[#allocation7 + $0x70] sm:$0xff]
    %v144 = vld [vmem:[#allocation7 + $0x78] sm:$0xff]
    %v145 = vld [vmem:[#allocation7 + $0x80] sm:$0xff]
    %v146 = vld [vmem:[#allocation7 + $0x88] sm:$0xff]
    %v147 = vld [vmem:[#allocation7 + $0x90] sm:$0xff]
    %v148 = vld [vmem:[#allocation7 + $0x98] sm:$0xff]
    %v149 = vld [vmem:[#allocation7 + $0xa0] sm:$0xff]
    %v150 = vld [vmem:[#allocation7 + $0xa8] sm:$0xff]
    %v151 = vld [vmem:[#allocation7 + $0xb0] sm:$0xff]
    %v152 = vld [vmem:[#allocation7 + $0xb8] sm:$0xff]
    %v153 = vld [vmem:[#allocation7 + $0xc0] sm:$0xff]
    %v154 = vld [vmem:[#allocation7 + $0xc8] sm:$0xff]
    %v155 = vld [vmem:[#allocation7 + $0xd0] sm:$0xff]
    %v156 = vld [vmem:[#allocation7 + $0xd8] sm:$0xff]
    %v157 = vld [vmem:[#allocation7 + $0xe0] sm:$0xff]
    %v158 = vld [vmem:[#allocation7 + $0xe8] sm:$0xff]
    %v159 = vld [vmem:[#allocation7 + $0xf0] sm:$0xff]
    %v160 = vld [vmem:[#allocation7 + $0xf8] sm:$0xff]
    %v161 = vld [vmem:[#allocation7 + $0x100] sm:$0xff]
    %v162 = vld [vmem:[#allocation7 + $0x108] sm:$0xff]
    %v163 = vld [vmem:[#allocation7 + $0x110] sm:$0xff]
    %v164 = vld [vmem:[#allocation7 + $0x118] sm:$0xff]
    %v165 = vld [vmem:[#allocation7 + $0x120] sm:$0xff]
    %v166 = vld [vmem:[#allocation7 + $0x128] sm:$0xff]
    %v167 = vld [vmem:[#allocation7 + $0x130] sm:$0xff]
    %v168 = vld [vmem:[#allocation7 + $0x138] sm:$0xff]
    %v169 = vld [vmem:[#allocation7 + $0x140] sm:$0xff]
    %v170 = vld [vmem:[#allocation7 + $0x148] sm:$0xff]
    %v171 = vld [vmem:[#allocation7 + $0x150] sm:$0xff]
    %v172 = vld [vmem:[#allocation7 + $0x158] sm:$0xff]
    %v173 = vld [vmem:[#allocation7 + $0x160] sm:$0xff]
    %v174 = vld [vmem:[#allocation7 + $0x168] sm:$0xff]
    %v175 = vld [vmem:[#allocation7 + $0x170] sm:$0xff]
    %v176 = vld [vmem:[#allocation7 + $0x178] sm:$0xff]
    %v177 = vld [vmem:[#allocation7 + $0x180] sm:$0xff]
    %v178 = vld [vmem:[#allocation7 + $0x188] sm:$0xff]
    %v179 = vld [vmem:[#allocation7 + $0x190] sm:$0xff]
    %v180 = vld [vmem:[#allocation7 + $0x198] sm:$0xff]
    %v181 = vld [vmem:[#allocation7 + $0x1a0] sm:$0xff]
    %v182 = vld [vmem:[#allocation7 + $0x1a8] sm:$0xff]
    %v183 = vld [vmem:[#allocation7 + $0x1b0] sm:$0xff]
    %v184 = vld [vmem:[#allocation7 + $0x1b8] sm:$0xff]
    %v185 = vld [vmem:[#allocation7 + $0x1c0] sm:$0xff]
    %v186 = vld [vmem:[#allocation7 + $0x1c8] sm:$0xff]
    %v187 = vld [vmem:[#allocation7 + $0x1d0] sm:$0xff]
    %v188 = vld [vmem:[#allocation7 + $0x1d8] sm:$0xff]
    %v189 = vld [vmem:[#allocation7 + $0x1e0] sm:$0xff]
    %v190 = vld [vmem:[#allocation7 + $0x1e8] sm:$0xff]
    %v191 = vld [vmem:[#allocation7 + $0x1f0] sm:$0xff]
    %v192 = vld [vmem:[#allocation7 + $0x1f8] sm:$0xff]
    %v193 = vld [vmem:[#allocation7 + $0x200] sm:$0xff]
    %v194 = vld [vmem:[#allocation7 + $0x208] sm:$0xff]
    %v195 = vld [vmem:[#allocation7 + $0x210] sm:$0xff]
    %v196 = vld [vmem:[#allocation7 + $0x218] sm:$0xff]
    %v197 = vld [vmem:[#allocation7 + $0x220] sm:$0xff]
    %v198 = vld [vmem:[#allocation7 + $0x228] sm:$0xff]
    %v199 = vld [vmem:[#allocation7 + $0x230] sm:$0xff]
    %v200 = vld [vmem:[#allocation7 + $0x238] sm:$0xff]
    %v201 = vld [vmem:[#allocation7 + $0x240] sm:$0xff]
    %v202 = vld [vmem:[#allocation7 + $0x248] sm:$0xff]
    %v203 = vld [vmem:[#allocation7 + $0x250] sm:$0xff]
    %v204 = vld [vmem:[#allocation7 + $0x258] sm:$0xff]
    %v205 = vld [vmem:[#allocation7 + $0x260] sm:$0xff]
    %v206 = vld [vmem:[#allocation7 + $0x268] sm:$0xff]
    %v207 = vld [vmem:[#allocation7 + $0x270] sm:$0xff]
    %v208 = vld [vmem:[#allocation7 + $0x278] sm:$0xff]
    %v209 = vld [vmem:[#allocation7 + $0x280] sm:$0xff]
    %v210 = vld [vmem:[#allocation7 + $0x288] sm:$0xff]
    %v211 = vld [vmem:[#allocation7 + $0x290] sm:$0xff]
    %v212 = vld [vmem:[#allocation7 + $0x298] sm:$0xff]
    %v213 = vld [vmem:[#allocation7 + $0x2a0] sm:$0xff]
    %v214 = vld [vmem:[#allocation7 + $0x2a8] sm:$0xff]
    %v215 = vld [vmem:[#allocation7 + $0x2b0] sm:$0xff]
    %v216 = vld [vmem:[#allocation7 + $0x2b8] sm:$0xff]
    %v217 = vld [vmem:[#allocation7 + $0x2c0] sm:$0xff]
    %v218 = vld [vmem:[#allocation7 + $0x2c8] sm:$0xff]
    %v219 = vld [vmem:[#allocation7 + $0x2d0] sm:$0xff]
    %v220 = vld [vmem:[#allocation7 + $0x2d8] sm:$0xff]
    %v221 = vld [vmem:[#allocation7 + $0x2e0] sm:$0xff]
    %v222 = vld [vmem:[#allocation7 + $0x2e8] sm:$0xff]
    %v223 = vld [vmem:[#allocation7 + $0x2f0] sm:$0xff]
    %v224 = vld [vmem:[#allocation7 + $0x2f8] sm:$0xff]
    %v225 = vld [vmem:[#allocation7 + $0x300] sm:$0xff]
    %v226 = vld [vmem:[#allocation7 + $0x308] sm:$0xff]
    %v227 = vld [vmem:[#allocation7 + $0x310] sm:$0xff]
    %v228 = vld [vmem:[#allocation7 + $0x318] sm:$0xff]
    %v229 = vld [vmem:[#allocation7 + $0x320] sm:$0xff]
    %v230 = vld [vmem:[#allocation7 + $0x328] sm:$0xff]
    %v231 = vld [vmem:[#allocation7 + $0x330] sm:$0xff]
    %v232 = vld [vmem:[#allocation7 + $0x338] sm:$0xff]
    %v233 = vld [vmem:[#allocation7 + $0x340] sm:$0xff]
    %v234 = vld [vmem:[#allocation7 + $0x348] sm:$0xff]
    %v235 = vld [vmem:[#allocation7 + $0x350] sm:$0xff]
    %v236 = vld [vmem:[#allocation7 + $0x358] sm:$0xff]
    %v237 = vld [vmem:[#allocation7 + $0x360] sm:$0xff]
    %v238 = vld [vmem:[#allocation7 + $0x368] sm:$0xff]
    %v239 = vld [vmem:[#allocation7 + $0x370] sm:$0xff]
    %v240 = vld [vmem:[#allocation7 + $0x378] sm:$0xff]
    %v241 = vld [vmem:[#allocation7 + $0x380] sm:$0xff]
    %v242 = vld [vmem:[#allocation7 + $0x388] sm:$0xff]
    %v243 = vld [vmem:[#allocation7 + $0x390] sm:$0xff]
    %v244 = vld [vmem:[#allocation7 + $0x398] sm:$0xff]
    %v245 = vld [vmem:[#allocation7 + $0x3a0] sm:$0xff]
    %v246 = vld [vmem:[#allocation7 + $0x3a8] sm:$0xff]
    %v247 = vld [vmem:[#allocation7 + $0x3b0] sm:$0xff]
    %v248 = vld [vmem:[#allocation7 + $0x3b8] sm:$0xff]
    %v249 = vld [vmem:[#allocation7 + $0x3c0] sm:$0xff]
    %v250 = vld [vmem:[#allocation7 + $0x3c8] sm:$0xff]
    %v251 = vld [vmem:[#allocation7 + $0x3d0] sm:$0xff]
    %v252 = vld [vmem:[#allocation7 + $0x3d8] sm:$0xff]
    %v253 = vld [vmem:[#allocation7 + $0x3e0] sm:$0xff]
    %v254 = vld [vmem:[#allocation7 + $0x3e8] sm:$0xff]
    %v255 = vld [vmem:[#allocation7 + $0x3f0] sm:$0xff]
    %v256 = vld [vmem:[#allocation7 + $0x3f8] sm:$0xff]
    %v257 = vld [vmem:[#allocation7 + $0x400] sm:$0xff]
    %v258 = vld [vmem:[#allocation7 + $0x408] sm:$0xff]
    %v259 = vld [vmem:[#allocation7 + $0x410] sm:$0xff]
    %v260 = vld [vmem:[#allocation7 + $0x418] sm:$0xff]
    %v261 = vld [vmem:[#allocation7 + $0x420] sm:$0xff]
    %v262 = vld [vmem:[#allocation7 + $0x428] sm:$0xff]
    %v263 = vld [vmem:[#allocation7 + $0x430] sm:$0xff]
    %v264 = vld [vmem:[#allocation7 + $0x438] sm:$0xff]
    %v265 = vld [vmem:[#allocation7 + $0x440] sm:$0xff]
    %v266 = vld [vmem:[#allocation7 + $0x448] sm:$0xff]
    %v267 = vld [vmem:[#allocation7 + $0x450] sm:$0xff]
    %v268 = vld [vmem:[#allocation7 + $0x458] sm:$0xff]
    %v269 = vld [vmem:[#allocation7 + $0x460] sm:$0xff]
    %v270 = vld [vmem:[#allocation7 + $0x468] sm:$0xff]
    %v271 = vld [vmem:[#allocation7 + $0x470] sm:$0xff]
    %v272 = vld [vmem:[#allocation7 + $0x478] sm:$0xff]
    %v273 = vld [vmem:[#allocation7 + $0x480] sm:$0xff]
    %v274 = vld [vmem:[#allocation7 + $0x488] sm:$0xff]
    %v275 = vld [vmem:[#allocation7 + $0x490] sm:$0xff]
    %v276 = vld [vmem:[#allocation7 + $0x498] sm:$0xff]
    %v277 = vld [vmem:[#allocation7 + $0x4a0] sm:$0xff]
    %v278 = vld [vmem:[#allocation7 + $0x4a8] sm:$0xff]
    %v279 = vld [vmem:[#allocation7 + $0x4b0] sm:$0xff]
    %v280 = vld [vmem:[#allocation7 + $0x4b8] sm:$0xff]
    %v281 = vld [vmem:[#allocation7 + $0x4c0] sm:$0xff]
    %v282 = vld [vmem:[#allocation7 + $0x4c8] sm:$0xff]
    %v283 = vld [vmem:[#allocation7 + $0x4d0] sm:$0xff]
    %v284 = vld [vmem:[#allocation7 + $0x4d8] sm:$0xff]
    %v285 = vld [vmem:[#allocation7 + $0x4e0] sm:$0xff]
    %v286 = vld [vmem:[#allocation7 + $0x4e8] sm:$0xff]
    %v287 = vld [vmem:[#allocation7 + $0x4f0] sm:$0xff]
    %v288 = vld [vmem:[#allocation7 + $0x4f8] sm:$0xff]
    %v289 = vld [vmem:[#allocation7 + $0x500] sm:$0xff]
    %v290 = vld [vmem:[#allocation7 + $0x508] sm:$0xff]
    %v291 = vld [vmem:[#allocation7 + $0x510] sm:$0xff]
    %v292 = vld [vmem:[#allocation7 + $0x518] sm:$0xff]
    %v293 = vld [vmem:[#allocation7 + $0x520] sm:$0xff]
    %v294 = vld [vmem:[#allocation7 + $0x528] sm:$0xff]
    %v295 = vld [vmem:[#allocation7 + $0x530] sm:$0xff]
    %v296 = vld [vmem:[#allocation7 + $0x538] sm:$0xff]
    %v297 = vld [vmem:[#allocation7 + $0x540] sm:$0xff]
    %v298 = vld [vmem:[#allocation7 + $0x548] sm:$0xff]
    %v299 = vld [vmem:[#allocation7 + $0x550] sm:$0xff]
    %v300 = vld [vmem:[#allocation7 + $0x558] sm:$0xff]
    %v301 = vld [vmem:[#allocation7 + $0x560] sm:$0xff]
    %v302 = vld [vmem:[#allocation7 + $0x568] sm:$0xff]
    %v303 = vld [vmem:[#allocation7 + $0x570] sm:$0xff]
    %v304 = vld [vmem:[#allocation7 + $0x578] sm:$0xff]
    %v305 = vld [vmem:[#allocation7 + $0x580] sm:$0xff]
    %v306 = vld [vmem:[#allocation7 + $0x588] sm:$0xff]
    %v307 = vld [vmem:[#allocation7 + $0x590] sm:$0xff]
    %v308 = vld [vmem:[#allocation7 + $0x598] sm:$0xff]
    %v309 = vld [vmem:[#allocation7 + $0x5a0] sm:$0xff]
    %v310 = vld [vmem:[#allocation7 + $0x5a8] sm:$0xff]
    %v311 = vld [vmem:[#allocation7 + $0x5b0] sm:$0xff]
    %v312 = vld [vmem:[#allocation7 + $0x5b8] sm:$0xff]
    %v313 = vld [vmem:[#allocation7 + $0x5c0] sm:$0xff]
    %v314 = vld [vmem:[#allocation7 + $0x5c8] sm:$0xff]
    %v315 = vld [vmem:[#allocation7 + $0x5d0] sm:$0xff]
    %v316 = vld [vmem:[#allocation7 + $0x5d8] sm:$0xff]
    %v317 = vld [vmem:[#allocation7 + $0x5e0] sm:$0xff]
    %v318 = vld [vmem:[#allocation7 + $0x5e8] sm:$0xff]
    %v319 = vld [vmem:[#allocation7 + $0x5f0] sm:$0xff]
    %v320 = vld [vmem:[#allocation7 + $0x5f8] sm:$0xff]
    %v327 = vunpack.c.l.b16 %v123
    %v328 = vunpack.c.h.b16 %v123
    %v329 = vunpack.c.l.b16 %v124
    %v330 = vunpack.c.h.b16 %v124
    %v331 = vunpack.c.l.b16 %v125
    %v332 = vunpack.c.h.b16 %v125
    %v333 = vunpack.c.l.b16 %v126
    %v334 = vunpack.c.h.b16 %v126
    %v335 = vunpack.c.l.b16 %v127
    %v336 = vunpack.c.h.b16 %v127
    %v337 = vunpack.c.l.b16 %v128
    %v338 = vunpack.c.h.b16 %v128
    %v339 = vpack.c.b16 %v333, %v327
    %v340 = vpack.c.b16 %v334, %v328
    %v341 = vpack.c.b16 %v335, %v329
    %v342 = vpack.c.b16 %v336, %v330
    %v343 = vpack.c.b16 %v337, %v331
    %v344 = vpack.c.b16 %v338, %v332
    %v543 = vunpack.c.l.b16 %v129
    %v544 = vunpack.c.h.b16 %v129
    %v545 = vunpack.c.l.b16 %v130
    %v546 = vunpack.c.h.b16 %v130
    %v547 = vunpack.c.l.b16 %v131
    %v548 = vunpack.c.h.b16 %v131
    %v549 = vunpack.c.l.b16 %v132
    %v550 = vunpack.c.h.b16 %v132
    %v551 = vunpack.c.l.b16 %v133
    %v552 = vunpack.c.h.b16 %v133
    %v553 = vunpack.c.l.b16 %v134
    %v554 = vunpack.c.h.b16 %v134
    %v555 = vunpack.c.l.b16 %v135
    %v556 = vunpack.c.h.b16 %v135
    %v557 = vunpack.c.l.b16 %v136
    %v558 = vunpack.c.h.b16 %v136
    %v559 = vunpack.c.l.b16 %v137
    %v560 = vunpack.c.h.b16 %v137
    %v561 = vunpack.c.l.b16 %v138
    %v562 = vunpack.c.h.b16 %v138
    %v563 = vunpack.c.l.b16 %v139
    %v564 = vunpack.c.h.b16 %v139
    %v565 = vunpack.c.l.b16 %v140
    %v566 = vunpack.c.h.b16 %v140
    %v567 = vunpack.c.l.b16 %v141
    %v568 = vunpack.c.h.b16 %v141
    %v569 = vunpack.c.l.b16 %v142
    %v570 = vunpack.c.h.b16 %v142
    %v571 = vunpack.c.l.b16 %v143
    %v572 = vunpack.c.h.b16 %v143
    %v573 = vunpack.c.l.b16 %v144
    %v574 = vunpack.c.h.b16 %v144
    %v575 = vunpack.c.l.b16 %v145
    %v576 = vunpack.c.h.b16 %v145
    %v577 = vunpack.c.l.b16 %v146
    %v578 = vunpack.c.h.b16 %v146
    %v579 = vunpack.c.l.b16 %v147
    %v580 = vunpack.c.h.b16 %v147
    %v581 = vunpack.c.l.b16 %v148
    %v582 = vunpack.c.h.b16 %v148
    %v583 = vunpack.c.l.b16 %v149
    %v584 = vunpack.c.h.b16 %v149
    %v585 = vunpack.c.l.b16 %v150
    %v586 = vunpack.c.h.b16 %v150
    %v587 = vunpack.c.l.b16 %v151
    %v588 = vunpack.c.h.b16 %v151
    %v589 = vunpack.c.l.b16 %v152
    %v590 = vunpack.c.h.b16 %v152
    %v591 = vunpack.c.l.b16 %v153
    %v592 = vunpack.c.h.b16 %v153
    %v593 = vunpack.c.l.b16 %v154
    %v594 = vunpack.c.h.b16 %v154
    %v595 = vunpack.c.l.b16 %v155
    %v596 = vunpack.c.h.b16 %v155
    %v597 = vunpack.c.l.b16 %v156
    %v598 = vunpack.c.h.b16 %v156
    %v599 = vunpack.c.l.b16 %v157
    %v600 = vunpack.c.h.b16 %v157
    %v601 = vunpack.c.l.b16 %v158
    %v602 = vunpack.c.h.b16 %v158
    %v603 = vunpack.c.l.b16 %v159
    %v604 = vunpack.c.h.b16 %v159
    %v605 = vunpack.c.l.b16 %v160
    %v606 = vunpack.c.h.b16 %v160
    %v607 = vunpack.c.l.b16 %v161
    %v608 = vunpack.c.h.b16 %v161
    %v609 = vunpack.c.l.b16 %v162
    %v610 = vunpack.c.h.b16 %v162
    %v611 = vunpack.c.l.b16 %v163
    %v612 = vunpack.c.h.b16 %v163
    %v613 = vunpack.c.l.b16 %v164
    %v614 = vunpack.c.h.b16 %v164
    %v615 = vunpack.c.l.b16 %v165
    %v616 = vunpack.c.h.b16 %v165
    %v617 = vunpack.c.l.b16 %v166
    %v618 = vunpack.c.h.b16 %v166
    %v619 = vunpack.c.l.b16 %v167
    %v620 = vunpack.c.h.b16 %v167
    %v621 = vunpack.c.l.b16 %v168
    %v622 = vunpack.c.h.b16 %v168
    %v623 = vunpack.c.l.b16 %v169
    %v624 = vunpack.c.h.b16 %v169
    %v625 = vunpack.c.l.b16 %v170
    %v626 = vunpack.c.h.b16 %v170
    %v627 = vunpack.c.l.b16 %v171
    %v628 = vunpack.c.h.b16 %v171
    %v629 = vunpack.c.l.b16 %v172
    %v630 = vunpack.c.h.b16 %v172
    %v631 = vunpack.c.l.b16 %v173
    %v632 = vunpack.c.h.b16 %v173
    %v633 = vunpack.c.l.b16 %v174
    %v634 = vunpack.c.h.b16 %v174
    %v635 = vunpack.c.l.b16 %v175
    %v636 = vunpack.c.h.b16 %v175
    %v637 = vunpack.c.l.b16 %v176
    %v638 = vunpack.c.h.b16 %v176
    %v639 = vunpack.c.l.b16 %v177
    %v640 = vunpack.c.h.b16 %v177
    %v641 = vunpack.c.l.b16 %v178
    %v642 = vunpack.c.h.b16 %v178
    %v643 = vunpack.c.l.b16 %v179
    %v644 = vunpack.c.h.b16 %v179
    %v645 = vunpack.c.l.b16 %v180
    %v646 = vunpack.c.h.b16 %v180
    %v647 = vunpack.c.l.b16 %v181
    %v648 = vunpack.c.h.b16 %v181
    %v649 = vunpack.c.l.b16 %v182
    %v650 = vunpack.c.h.b16 %v182
    %v651 = vunpack.c.l.b16 %v183
    %v652 = vunpack.c.h.b16 %v183
    %v653 = vunpack.c.l.b16 %v184
    %v654 = vunpack.c.h.b16 %v184
    %v655 = vunpack.c.l.b16 %v185
    %v656 = vunpack.c.h.b16 %v185
    %v657 = vunpack.c.l.b16 %v186
    %v658 = vunpack.c.h.b16 %v186
    %v659 = vunpack.c.l.b16 %v187
    %v660 = vunpack.c.h.b16 %v187
    %v661 = vunpack.c.l.b16 %v188
    %v662 = vunpack.c.h.b16 %v188
    %v663 = vunpack.c.l.b16 %v189
    %v664 = vunpack.c.h.b16 %v189
    %v665 = vunpack.c.l.b16 %v190
    %v666 = vunpack.c.h.b16 %v190
    %v667 = vunpack.c.l.b16 %v191
    %v668 = vunpack.c.h.b16 %v191
    %v669 = vunpack.c.l.b16 %v192
    %v670 = vunpack.c.h.b16 %v192
    %v671 = vunpack.c.l.b16 %v193
    %v672 = vunpack.c.h.b16 %v193
    %v673 = vunpack.c.l.b16 %v194
    %v674 = vunpack.c.h.b16 %v194
    %v675 = vunpack.c.l.b16 %v195
    %v676 = vunpack.c.h.b16 %v195
    %v677 = vunpack.c.l.b16 %v196
    %v678 = vunpack.c.h.b16 %v196
    %v679 = vunpack.c.l.b16 %v197
    %v680 = vunpack.c.h.b16 %v197
    %v681 = vunpack.c.l.b16 %v198
    %v682 = vunpack.c.h.b16 %v198
    %v683 = vunpack.c.l.b16 %v199
    %v684 = vunpack.c.h.b16 %v199
    %v685 = vunpack.c.l.b16 %v200
    %v686 = vunpack.c.h.b16 %v200
    %v687 = vunpack.c.l.b16 %v201
    %v688 = vunpack.c.h.b16 %v201
    %v689 = vunpack.c.l.b16 %v202
    %v690 = vunpack.c.h.b16 %v202
    %v691 = vunpack.c.l.b16 %v203
    %v692 = vunpack.c.h.b16 %v203
    %v693 = vunpack.c.l.b16 %v204
    %v694 = vunpack.c.h.b16 %v204
    %v695 = vunpack.c.l.b16 %v205
    %v696 = vunpack.c.h.b16 %v205
    %v697 = vunpack.c.l.b16 %v206
    %v698 = vunpack.c.h.b16 %v206
    %v699 = vunpack.c.l.b16 %v207
    %v700 = vunpack.c.h.b16 %v207
    %v701 = vunpack.c.l.b16 %v208
    %v702 = vunpack.c.h.b16 %v208
    %v703 = vunpack.c.l.b16 %v209
    %v704 = vunpack.c.h.b16 %v209
    %v705 = vunpack.c.l.b16 %v210
    %v706 = vunpack.c.h.b16 %v210
    %v707 = vunpack.c.l.b16 %v211
    %v708 = vunpack.c.h.b16 %v211
    %v709 = vunpack.c.l.b16 %v212
    %v710 = vunpack.c.h.b16 %v212
    %v711 = vunpack.c.l.b16 %v213
    %v712 = vunpack.c.h.b16 %v213
    %v713 = vunpack.c.l.b16 %v214
    %v714 = vunpack.c.h.b16 %v214
    %v715 = vunpack.c.l.b16 %v215
    %v716 = vunpack.c.h.b16 %v215
    %v717 = vunpack.c.l.b16 %v216
    %v718 = vunpack.c.h.b16 %v216
    %v719 = vunpack.c.l.b16 %v217
    %v720 = vunpack.c.h.b16 %v217
    %v721 = vunpack.c.l.b16 %v218
    %v722 = vunpack.c.h.b16 %v218
    %v723 = vunpack.c.l.b16 %v219
    %v724 = vunpack.c.h.b16 %v219
    %v725 = vunpack.c.l.b16 %v220
    %v726 = vunpack.c.h.b16 %v220
    %v727 = vunpack.c.l.b16 %v221
    %v728 = vunpack.c.h.b16 %v221
    %v729 = vunpack.c.l.b16 %v222
    %v730 = vunpack.c.h.b16 %v222
    %v731 = vunpack.c.l.b16 %v223
    %v732 = vunpack.c.h.b16 %v223
    %v733 = vunpack.c.l.b16 %v224
    %v734 = vunpack.c.h.b16 %v224
    %v735 = vunpack.c.l.b16 %v225
    %v736 = vunpack.c.h.b16 %v225
    %v737 = vunpack.c.l.b16 %v226
    %v738 = vunpack.c.h.b16 %v226
    %v739 = vunpack.c.l.b16 %v227
    %v740 = vunpack.c.h.b16 %v227
    %v741 = vunpack.c.l.b16 %v228
    %v742 = vunpack.c.h.b16 %v228
    %v743 = vunpack.c.l.b16 %v229
    %v744 = vunpack.c.h.b16 %v229
    %v745 = vunpack.c.l.b16 %v230
    %v746 = vunpack.c.h.b16 %v230
    %v747 = vunpack.c.l.b16 %v231
    %v748 = vunpack.c.h.b16 %v231
    %v749 = vunpack.c.l.b16 %v232
    %v750 = vunpack.c.h.b16 %v232
    %v751 = vunpack.c.l.b16 %v233
    %v752 = vunpack.c.h.b16 %v233
    %v753 = vunpack.c.l.b16 %v234
    %v754 = vunpack.c.h.b16 %v234
    %v755 = vunpack.c.l.b16 %v235
    %v756 = vunpack.c.h.b16 %v235
    %v757 = vunpack.c.l.b16 %v236
    %v758 = vunpack.c.h.b16 %v236
    %v759 = vunpack.c.l.b16 %v237
    %v760 = vunpack.c.h.b16 %v237
    %v761 = vunpack.c.l.b16 %v238
    %v762 = vunpack.c.h.b16 %v238
    %v763 = vunpack.c.l.b16 %v239
    %v764 = vunpack.c.h.b16 %v239
    %v765 = vunpack.c.l.b16 %v240
    %v766 = vunpack.c.h.b16 %v240
    %v767 = vunpack.c.l.b16 %v241
    %v768 = vunpack.c.h.b16 %v241
    %v769 = vunpack.c.l.b16 %v242
    %v770 = vunpack.c.h.b16 %v242
    %v771 = vunpack.c.l.b16 %v243
    %v772 = vunpack.c.h.b16 %v243
    %v773 = vunpack.c.l.b16 %v244
    %v774 = vunpack.c.h.b16 %v244
    %v775 = vunpack.c.l.b16 %v245
    %v776 = vunpack.c.h.b16 %v245
    %v777 = vunpack.c.l.b16 %v246
    %v778 = vunpack.c.h.b16 %v246
    %v779 = vunpack.c.l.b16 %v247
    %v780 = vunpack.c.h.b16 %v247
    %v781 = vunpack.c.l.b16 %v248
    %v782 = vunpack.c.h.b16 %v248
    %v783 = vunpack.c.l.b16 %v249
    %v784 = vunpack.c.h.b16 %v249
    %v785 = vunpack.c.l.b16 %v250
    %v786 = vunpack.c.h.b16 %v250
    %v787 = vunpack.c.l.b16 %v251
    %v788 = vunpack.c.h.b16 %v251
    %v789 = vunpack.c.l.b16 %v252
    %v790 = vunpack.c.h.b16 %v252
    %v791 = vunpack.c.l.b16 %v253
    %v792 = vunpack.c.h.b16 %v253
    %v793 = vunpack.c.l.b16 %v254
    %v794 = vunpack.c.h.b16 %v254
    %v795 = vunpack.c.l.b16 %v255
    %v796 = vunpack.c.h.b16 %v255
    %v797 = vunpack.c.l.b16 %v256
    %v798 = vunpack.c.h.b16 %v256
    %v799 = vunpack.c.l.b16 %v257
    %v800 = vunpack.c.h.b16 %v257
    %v801 = vunpack.c.l.b16 %v258
    %v802 = vunpack.c.h.b16 %v258
    %v803 = vunpack.c.l.b16 %v259
    %v804 = vunpack.c.h.b16 %v259
    %v805 = vunpack.c.l.b16 %v260
    %v806 = vunpack.c.h.b16 %v260
    %v807 = vunpack.c.l.b16 %v261
    %v808 = vunpack.c.h.b16 %v261
    %v809 = vunpack.c.l.b16 %v262
    %v810 = vunpack.c.h.b16 %v262
    %v811 = vunpack.c.l.b16 %v263
    %v812 = vunpack.c.h.b16 %v263
    %v813 = vunpack.c.l.b16 %v264
    %v814 = vunpack.c.h.b16 %v264
    %v815 = vunpack.c.l.b16 %v265
    %v816 = vunpack.c.h.b16 %v265
    %v817 = vunpack.c.l.b16 %v266
    %v818 = vunpack.c.h.b16 %v266
    %v819 = vunpack.c.l.b16 %v267
    %v820 = vunpack.c.h.b16 %v267
    %v821 = vunpack.c.l.b16 %v268
    %v822 = vunpack.c.h.b16 %v268
    %v823 = vunpack.c.l.b16 %v269
    %v824 = vunpack.c.h.b16 %v269
    %v825 = vunpack.c.l.b16 %v270
    %v826 = vunpack.c.h.b16 %v270
    %v827 = vunpack.c.l.b16 %v271
    %v828 = vunpack.c.h.b16 %v271
    %v829 = vunpack.c.l.b16 %v272
    %v830 = vunpack.c.h.b16 %v272
    %v831 = vunpack.c.l.b16 %v273
    %v832 = vunpack.c.h.b16 %v273
    %v833 = vunpack.c.l.b16 %v274
    %v834 = vunpack.c.h.b16 %v274
    %v835 = vunpack.c.l.b16 %v275
    %v836 = vunpack.c.h.b16 %v275
    %v837 = vunpack.c.l.b16 %v276
    %v838 = vunpack.c.h.b16 %v276
    %v839 = vunpack.c.l.b16 %v277
    %v840 = vunpack.c.h.b16 %v277
    %v841 = vunpack.c.l.b16 %v278
    %v842 = vunpack.c.h.b16 %v278
    %v843 = vunpack.c.l.b16 %v279
    %v844 = vunpack.c.h.b16 %v279
    %v845 = vunpack.c.l.b16 %v280
    %v846 = vunpack.c.h.b16 %v280
    %v847 = vunpack.c.l.b16 %v281
    %v848 = vunpack.c.h.b16 %v281
    %v849 = vunpack.c.l.b16 %v282
    %v850 = vunpack.c.h.b16 %v282
    %v851 = vunpack.c.l.b16 %v283
    %v852 = vunpack.c.h.b16 %v283
    %v853 = vunpack.c.l.b16 %v284
    %v854 = vunpack.c.h.b16 %v284
    %v855 = vunpack.c.l.b16 %v285
    %v856 = vunpack.c.h.b16 %v285
    %v857 = vunpack.c.l.b16 %v286
    %v858 = vunpack.c.h.b16 %v286
    %v859 = vunpack.c.l.b16 %v287
    %v860 = vunpack.c.h.b16 %v287
    %v861 = vunpack.c.l.b16 %v288
    %v862 = vunpack.c.h.b16 %v288
    %v863 = vunpack.c.l.b16 %v289
    %v864 = vunpack.c.h.b16 %v289
    %v865 = vunpack.c.l.b16 %v290
    %v866 = vunpack.c.h.b16 %v290
    %v867 = vunpack.c.l.b16 %v291
    %v868 = vunpack.c.h.b16 %v291
    %v869 = vunpack.c.l.b16 %v292
    %v870 = vunpack.c.h.b16 %v292
    %v871 = vunpack.c.l.b16 %v293
    %v872 = vunpack.c.h.b16 %v293
    %v873 = vunpack.c.l.b16 %v294
    %v874 = vunpack.c.h.b16 %v294
    %v875 = vunpack.c.l.b16 %v295
    %v876 = vunpack.c.h.b16 %v295
    %v877 = vunpack.c.l.b16 %v296
    %v878 = vunpack.c.h.b16 %v296
    %v879 = vunpack.c.l.b16 %v297
    %v880 = vunpack.c.h.b16 %v297
    %v881 = vunpack.c.l.b16 %v298
    %v882 = vunpack.c.h.b16 %v298
    %v883 = vunpack.c.l.b16 %v299
    %v884 = vunpack.c.h.b16 %v299
    %v885 = vunpack.c.l.b16 %v300
    %v886 = vunpack.c.h.b16 %v300
    %v887 = vunpack.c.l.b16 %v301
    %v888 = vunpack.c.h.b16 %v301
    %v889 = vunpack.c.l.b16 %v302
    %v890 = vunpack.c.h.b16 %v302
    %v891 = vunpack.c.l.b16 %v303
    %v892 = vunpack.c.h.b16 %v303
    %v893 = vunpack.c.l.b16 %v304
    %v894 = vunpack.c.h.b16 %v304
    %v895 = vunpack.c.l.b16 %v305
    %v896 = vunpack.c.h.b16 %v305
    %v897 = vunpack.c.l.b16 %v306
    %v898 = vunpack.c.h.b16 %v306
    %v899 = vunpack.c.l.b16 %v307
    %v900 = vunpack.c.h.b16 %v307
    %v901 = vunpack.c.l.b16 %v308
    %v902 = vunpack.c.h.b16 %v308
    %v903 = vunpack.c.l.b16 %v309
    %v904 = vunpack.c.h.b16 %v309
    %v905 = vunpack.c.l.b16 %v310
    %v906 = vunpack.c.h.b16 %v310
    %v907 = vunpack.c.l.b16 %v311
    %v908 = vunpack.c.h.b16 %v311
    %v909 = vunpack.c.l.b16 %v312
    %v910 = vunpack.c.h.b16 %v312
    %v911 = vunpack.c.l.b16 %v313
    %v912 = vunpack.c.h.b16 %v313
    %v913 = vunpack.c.l.b16 %v314
    %v914 = vunpack.c.h.b16 %v314
    %v915 = vunpack.c.l.b16 %v315
    %v916 = vunpack.c.h.b16 %v315
    %v917 = vunpack.c.l.b16 %v316
    %v918 = vunpack.c.h.b16 %v316
    %v919 = vunpack.c.l.b16 %v317
    %v920 = vunpack.c.h.b16 %v317
    %v921 = vunpack.c.l.b16 %v318
    %v922 = vunpack.c.h.b16 %v318
    %v923 = vunpack.c.l.b16 %v319
    %v924 = vunpack.c.h.b16 %v319
    %v925 = vunpack.c.l.b16 %v320
    %v926 = vunpack.c.h.b16 %v320
    %v927 = vpack.c.b16 %v547, %v543
    %v928 = vpack.c.b16 %v548, %v544
    %v929 = vpack.c.b16 %v549, %v545
    %v930 = vpack.c.b16 %v550, %v546
    %v931 = vpack.c.b16 %v555, %v551
    %v932 = vpack.c.b16 %v556, %v552
    %v933 = vpack.c.b16 %v557, %v553
    %v934 = vpack.c.b16 %v558, %v554
    %v935 = vpack.c.b16 %v563, %v559
    %v936 = vpack.c.b16 %v564, %v560
    %v937 = vpack.c.b16 %v565, %v561
    %v938 = vpack.c.b16 %v566, %v562
    %v939 = vpack.c.b16 %v571, %v567
    %v940 = vpack.c.b16 %v572, %v568
    %v941 = vpack.c.b16 %v573, %v569
    %v942 = vpack.c.b16 %v574, %v570
    %v943 = vpack.c.b16 %v579, %v575
    %v944 = vpack.c.b16 %v580, %v576
    %v945 = vpack.c.b16 %v581, %v577
    %v946 = vpack.c.b16 %v582, %v578
    %v947 = vpack.c.b16 %v587, %v583
    %v948 = vpack.c.b16 %v588, %v584
    %v949 = vpack.c.b16 %v589, %v585
    %v950 = vpack.c.b16 %v590, %v586
    %v951 = vpack.c.b16 %v595, %v591
    %v952 = vpack.c.b16 %v596, %v592
    %v953 = vpack.c.b16 %v597, %v593
    %v954 = vpack.c.b16 %v598, %v594
    %v955 = vpack.c.b16 %v603, %v599
    %v956 = vpack.c.b16 %v604, %v600
    %v957 = vpack.c.b16 %v605, %v601
    %v958 = vpack.c.b16 %v606, %v602
    %v959 = vpack.c.b16 %v611, %v607
    %v960 = vpack.c.b16 %v612, %v608
    %v961 = vpack.c.b16 %v613, %v609
    %v962 = vpack.c.b16 %v614, %v610
    %v963 = vpack.c.b16 %v619, %v615
    %v964 = vpack.c.b16 %v620, %v616
    %v965 = vpack.c.b16 %v621, %v617
    %v966 = vpack.c.b16 %v622, %v618
    %v967 = vpack.c.b16 %v627, %v623
    %v968 = vpack.c.b16 %v628, %v624
    %v969 = vpack.c.b16 %v629, %v625
    %v970 = vpack.c.b16 %v630, %v626
    %v971 = vpack.c.b16 %v635, %v631
    %v972 = vpack.c.b16 %v636, %v632
    %v973 = vpack.c.b16 %v637, %v633
    %v974 = vpack.c.b16 %v638, %v634
    %v975 = vpack.c.b16 %v643, %v639
    %v976 = vpack.c.b16 %v644, %v640
    %v977 = vpack.c.b16 %v645, %v641
    %v978 = vpack.c.b16 %v646, %v642
    %v979 = vpack.c.b16 %v651, %v647
    %v980 = vpack.c.b16 %v652, %v648
    %v981 = vpack.c.b16 %v653, %v649
    %v982 = vpack.c.b16 %v654, %v650
    %v983 = vpack.c.b16 %v659, %v655
    %v984 = vpack.c.b16 %v660, %v656
    %v985 = vpack.c.b16 %v661, %v657
    %v986 = vpack.c.b16 %v662, %v658
    %v987 = vpack.c.b16 %v667, %v663
    %v988 = vpack.c.b16 %v668, %v664
    %v989 = vpack.c.b16 %v669, %v665
    %v990 = vpack.c.b16 %v670, %v666
    %v991 = vpack.c.b16 %v675, %v671
    %v992 = vpack.c.b16 %v676, %v672
    %v993 = vpack.c.b16 %v677, %v673
    %v994 = vpack.c.b16 %v678, %v674
    %v995 = vpack.c.b16 %v683, %v679
    %v996 = vpack.c.b16 %v684, %v680
    %v997 = vpack.c.b16 %v685, %v681
    %v998 = vpack.c.b16 %v686, %v682
    %v999 = vpack.c.b16 %v691, %v687
    %v1000 = vpack.c.b16 %v692, %v688
    %v1001 = vpack.c.b16 %v693, %v689
    %v1002 = vpack.c.b16 %v694, %v690
    %v1003 = vpack.c.b16 %v699, %v695
    %v1004 = vpack.c.b16 %v700, %v696
    %v1005 = vpack.c.b16 %v701, %v697
    %v1006 = vpack.c.b16 %v702, %v698
    %v1007 = vpack.c.b16 %v707, %v703
    %v1008 = vpack.c.b16 %v708, %v704
    %v1009 = vpack.c.b16 %v709, %v705
    %v1010 = vpack.c.b16 %v710, %v706
    %v1011 = vpack.c.b16 %v715, %v711
    %v1012 = vpack.c.b16 %v716, %v712
    %v1013 = vpack.c.b16 %v717, %v713
    %v1014 = vpack.c.b16 %v718, %v714
    %v1015 = vpack.c.b16 %v723, %v719
    %v1016 = vpack.c.b16 %v724, %v720
    %v1017 = vpack.c.b16 %v725, %v721
    %v1018 = vpack.c.b16 %v726, %v722
    %v1019 = vpack.c.b16 %v731, %v727
    %v1020 = vpack.c.b16 %v732, %v728
    %v1021 = vpack.c.b16 %v733, %v729
    %v1022 = vpack.c.b16 %v734, %v730
    %v1023 = vpack.c.b16 %v739, %v735
    %v1024 = vpack.c.b16 %v740, %v736
    %v1025 = vpack.c.b16 %v741, %v737
    %v1026 = vpack.c.b16 %v742, %v738
    %v1027 = vpack.c.b16 %v747, %v743
    %v1028 = vpack.c.b16 %v748, %v744
    %v1029 = vpack.c.b16 %v749, %v745
    %v1030 = vpack.c.b16 %v750, %v746
    %v1031 = vpack.c.b16 %v755, %v751
    %v1032 = vpack.c.b16 %v756, %v752
    %v1033 = vpack.c.b16 %v757, %v753
    %v1034 = vpack.c.b16 %v758, %v754
    %v1035 = vpack.c.b16 %v763, %v759
    %v1036 = vpack.c.b16 %v764, %v760
    %v1037 = vpack.c.b16 %v765, %v761
    %v1038 = vpack.c.b16 %v766, %v762
    %v1039 = vpack.c.b16 %v771, %v767
    %v1040 = vpack.c.b16 %v772, %v768
    %v1041 = vpack.c.b16 %v773, %v769
    %v1042 = vpack.c.b16 %v774, %v770
    %v1043 = vpack.c.b16 %v779, %v775
    %v1044 = vpack.c.b16 %v780, %v776
    %v1045 = vpack.c.b16 %v781, %v777
    %v1046 = vpack.c.b16 %v782, %v778
    %v1047 = vpack.c.b16 %v787, %v783
    %v1048 = vpack.c.b16 %v788, %v784
    %v1049 = vpack.c.b16 %v789, %v785
    %v1050 = vpack.c.b16 %v790, %v786
    %v1051 = vpack.c.b16 %v795, %v791
    %v1052 = vpack.c.b16 %v796, %v792
    %v1053 = vpack.c.b16 %v797, %v793
    %v1054 = vpack.c.b16 %v798, %v794
    %v1055 = vpack.c.b16 %v803, %v799
    %v1056 = vpack.c.b16 %v804, %v800
    %v1057 = vpack.c.b16 %v805, %v801
    %v1058 = vpack.c.b16 %v806, %v802
    %v1059 = vpack.c.b16 %v811, %v807
    %v1060 = vpack.c.b16 %v812, %v808
    %v1061 = vpack.c.b16 %v813, %v809
    %v1062 = vpack.c.b16 %v814, %v810
    %v1063 = vpack.c.b16 %v819, %v815
    %v1064 = vpack.c.b16 %v820, %v816
    %v1065 = vpack.c.b16 %v821, %v817
    %v1066 = vpack.c.b16 %v822, %v818
    %v1067 = vpack.c.b16 %v827, %v823
    %v1068 = vpack.c.b16 %v828, %v824
    %v1069 = vpack.c.b16 %v829, %v825
    %v1070 = vpack.c.b16 %v830, %v826
    %v1071 = vpack.c.b16 %v835, %v831
    %v1072 = vpack.c.b16 %v836, %v832
    %v1073 = vpack.c.b16 %v837, %v833
    %v1074 = vpack.c.b16 %v838, %v834
    %v1075 = vpack.c.b16 %v843, %v839
    %v1076 = vpack.c.b16 %v844, %v840
    %v1077 = vpack.c.b16 %v845, %v841
    %v1078 = vpack.c.b16 %v846, %v842
    %v1079 = vpack.c.b16 %v851, %v847
    %v1080 = vpack.c.b16 %v852, %v848
    %v1081 = vpack.c.b16 %v853, %v849
    %v1082 = vpack.c.b16 %v854, %v850
    %v1083 = vpack.c.b16 %v859, %v855
    %v1084 = vpack.c.b16 %v860, %v856
    %v1085 = vpack.c.b16 %v861, %v857
    %v1086 = vpack.c.b16 %v862, %v858
    %v1087 = vpack.c.b16 %v867, %v863
    %v1088 = vpack.c.b16 %v868, %v864
    %v1089 = vpack.c.b16 %v869, %v865
    %v1090 = vpack.c.b16 %v870, %v866
    %v1091 = vpack.c.b16 %v875, %v871
    %v1092 = vpack.c.b16 %v876, %v872
    %v1093 = vpack.c.b16 %v877, %v873
    %v1094 = vpack.c.b16 %v878, %v874
    %v1095 = vpack.c.b16 %v883, %v879
    %v1096 = vpack.c.b16 %v884, %v880
    %v1097 = vpack.c.b16 %v885, %v881
    %v1098 = vpack.c.b16 %v886, %v882
    %v1099 = vpack.c.b16 %v891, %v887
    %v1100 = vpack.c.b16 %v892, %v888
    %v1101 = vpack.c.b16 %v893, %v889
    %v1102 = vpack.c.b16 %v894, %v890
    %v1103 = vpack.c.b16 %v899, %v895
    %v1104 = vpack.c.b16 %v900, %v896
    %v1105 = vpack.c.b16 %v901, %v897
    %v1106 = vpack.c.b16 %v902, %v898
    %v1107 = vpack.c.b16 %v907, %v903
    %v1108 = vpack.c.b16 %v908, %v904
    %v1109 = vpack.c.b16 %v909, %v905
    %v1110 = vpack.c.b16 %v910, %v906
    %v1111 = vpack.c.b16 %v915, %v911
    %v1112 = vpack.c.b16 %v916, %v912
    %v1113 = vpack.c.b16 %v917, %v913
    %v1114 = vpack.c.b16 %v918, %v914
    %v1115 = vpack.c.b16 %v923, %v919
    %v1116 = vpack.c.b16 %v924, %v920
    %v1117 = vpack.c.b16 %v925, %v921
    %v1118 = vpack.c.b16 %v926, %v922
    %1311 = vmatpush.bf16.msra.mxu0 %v955
    %1312 = vmatpush.bf16.msra.mxu0 %v951
    %1313 = vmatpush.bf16.msra.mxu0 %v947
    %1314 = vmatpush.bf16.msra.mxu0 %v943
    %1315 = vmatpush.bf16.msra.mxu0 %v939
    %1316 = vmatpush.bf16.msra.mxu0 %v935
    %1317 = vmatpush.bf16.msra.mxu0 %v931
    %1318 = vmatpush.bf16.msra.mxu0 %v927
    %1319 = vmatmul.bf16.gmra.mxu0 %v339
    %v1320 = vpop.f32.mrf.mxu0
    %v1321 = vadd.f32 0.0, %v1320
    %v1322 = vpop.f32.mrf.mxu0
    %v1323 = vadd.f32 0.0, %v1322
    %1324 = vdwg.mxu0
    %1325 = vmatpush.bf16.msra.mxu0 %v987
    %1326 = vmatpush.bf16.msra.mxu0 %v983
    %1327 = vmatpush.bf16.msra.mxu0 %v979
    %1328 = vmatpush.bf16.msra.mxu0 %v975
    %1329 = vmatpush.bf16.msra.mxu0 %v971
    %1330 = vmatpush.bf16.msra.mxu0 %v967
    %1331 = vmatpush.bf16.msra.mxu0 %v963
    %1332 = vmatpush.bf16.msra.mxu0 %v959
    %1333 = vmatmul.bf16.gmra.mxu0 %v340
    %v1334 = vpop.f32.mrf.mxu0
    %v1335 = vadd.f32 %v1321, %v1334
    %v1336 = vpop.f32.mrf.mxu0
    %v1337 = vadd.f32 %v1323, %v1336
    %1338 = vdwg.mxu0
    %1339 = vmatpush.bf16.msra.mxu0 %v1019
    %1340 = vmatpush.bf16.msra.mxu0 %v1015
    %1341 = vmatpush.bf16.msra.mxu0 %v1011
    %1342 = vmatpush.bf16.msra.mxu0 %v1007
    %1343 = vmatpush.bf16.msra.mxu0 %v1003
    %1344 = vmatpush.bf16.msra.mxu0 %v999
    %1345 = vmatpush.bf16.msra.mxu0 %v995
    %1346 = vmatpush.bf16.msra.mxu0 %v991
    %1347 = vmatmul.bf16.gmra.mxu0 %v341
    %v1348 = vpop.f32.mrf.mxu0
    %v1349 = vadd.f32 %v1335, %v1348
    %v1350 = vpop.f32.mrf.mxu0
    %v1351 = vadd.f32 %v1337, %v1350
    %1352 = vdwg.mxu0
    %1353 = vmatpush.bf16.msra.mxu0 %v1051
    %1354 = vmatpush.bf16.msra.mxu0 %v1047
    %1355 = vmatpush.bf16.msra.mxu0 %v1043
    %1356 = vmatpush.bf16.msra.mxu0 %v1039
    %1357 = vmatpush.bf16.msra.mxu0 %v1035
    %1358 = vmatpush.bf16.msra.mxu0 %v1031
    %1359 = vmatpush.bf16.msra.mxu0 %v1027
    %1360 = vmatpush.bf16.msra.mxu0 %v1023
    %1361 = vmatmul.bf16.gmra.mxu0 %v342
    %v1362 = vpop.f32.mrf.mxu0
    %v1363 = vadd.f32 %v1349, %v1362
    %v1364 = vpop.f32.mrf.mxu0
    %v1365 = vadd.f32 %v1351, %v1364
    %1366 = vdwg.mxu0
    %1367 = vmatpush.bf16.msra.mxu0 %v1083
    %1368 = vmatpush.bf16.msra.mxu0 %v1079
    %1369 = vmatpush.bf16.msra.mxu0 %v1075
    %1370 = vmatpush.bf16.msra.mxu0 %v1071
    %1371 = vmatpush.bf16.msra.mxu0 %v1067
    %1372 = vmatpush.bf16.msra.mxu0 %v1063
    %1373 = vmatpush.bf16.msra.mxu0 %v1059
    %1374 = vmatpush.bf16.msra.mxu0 %v1055
    %1375 = vmatmul.bf16.gmra.mxu0 %v343
    %v1376 = vpop.f32.mrf.mxu0
    %v1377 = vadd.f32 %v1363, %v1376
    %v1378 = vpop.f32.mrf.mxu0
    %v1379 = vadd.f32 %v1365, %v1378
    %1380 = vdwg.mxu0
    %1381 = vmatpush.bf16.msra.mxu0 %v1115
    %1382 = vmatpush.bf16.msra.mxu0 %v1111
    %1383 = vmatpush.bf16.msra.mxu0 %v1107
    %1384 = vmatpush.bf16.msra.mxu0 %v1103
    %1385 = vmatpush.bf16.msra.mxu0 %v1099
    %1386 = vmatpush.bf16.msra.mxu0 %v1095
    %1387 = vmatpush.bf16.msra.mxu0 %v1091
    %1388 = vmatpush.bf16.msra.mxu0 %v1087
    %1389 = vmatmul.bf16.gmra.mxu0 %v344
    %v1390 = vpop.f32.mrf.mxu0
    %v1391 = vadd.f32 %v1377, %v1390
    %v1392 = vpop.f32.mrf.mxu0
    %v1393 = vadd.f32 %v1379, %v1392
    %1394 = vdwg.mxu0
    %1395 = vmatpush.bf16.msra.mxu0 %v956
    %1396 = vmatpush.bf16.msra.mxu0 %v952
    %1397 = vmatpush.bf16.msra.mxu0 %v948
    %1398 = vmatpush.bf16.msra.mxu0 %v944
    %1399 = vmatpush.bf16.msra.mxu0 %v940
    %1400 = vmatpush.bf16.msra.mxu0 %v936
    %1401 = vmatpush.bf16.msra.mxu0 %v932
    %1402 = vmatpush.bf16.msra.mxu0 %v928
    %1403 = vmatmul.bf16.gmra.mxu0 %v339
    %v1404 = vpop.f32.mrf.mxu0
    %v1405 = vadd.f32 0.0, %v1404
    %v1406 = vpop.f32.mrf.mxu0
    %v1407 = vadd.f32 0.0, %v1406
    %1408 = vdwg.mxu0
    %1409 = vmatpush.bf16.msra.mxu0 %v988
    %1410 = vmatpush.bf16.msra.mxu0 %v984
    %1411 = vmatpush.bf16.msra.mxu0 %v980
    %1412 = vmatpush.bf16.msra.mxu0 %v976
    %1413 = vmatpush.bf16.msra.mxu0 %v972
    %1414 = vmatpush.bf16.msra.mxu0 %v968
    %1415 = vmatpush.bf16.msra.mxu0 %v964
    %1416 = vmatpush.bf16.msra.mxu0 %v960
    %1417 = vmatmul.bf16.gmra.mxu0 %v340
    %v1418 = vpop.f32.mrf.mxu0
    %v1419 = vadd.f32 %v1405, %v1418
    %v1420 = vpop.f32.mrf.mxu0
    %v1421 = vadd.f32 %v1407, %v1420
    %1422 = vdwg.mxu0
    %1423 = vmatpush.bf16.msra.mxu0 %v1020
    %1424 = vmatpush.bf16.msra.mxu0 %v1016
    %1425 = vmatpush.bf16.msra.mxu0 %v1012
    %1426 = vmatpush.bf16.msra.mxu0 %v1008
    %1427 = vmatpush.bf16.msra.mxu0 %v1004
    %1428 = vmatpush.bf16.msra.mxu0 %v1000
    %1429 = vmatpush.bf16.msra.mxu0 %v996
    %1430 = vmatpush.bf16.msra.mxu0 %v992
    %1431 = vmatmul.bf16.gmra.mxu0 %v341
    %v1432 = vpop.f32.mrf.mxu0
    %v1433 = vadd.f32 %v1419, %v1432
    %v1434 = vpop.f32.mrf.mxu0
    %v1435 = vadd.f32 %v1421, %v1434
    %1436 = vdwg.mxu0
    %1437 = vmatpush.bf16.msra.mxu0 %v1052
    %1438 = vmatpush.bf16.msra.mxu0 %v1048
    %1439 = vmatpush.bf16.msra.mxu0 %v1044
    %1440 = vmatpush.bf16.msra.mxu0 %v1040
    %1441 = vmatpush.bf16.msra.mxu0 %v1036
    %1442 = vmatpush.bf16.msra.mxu0 %v1032
    %1443 = vmatpush.bf16.msra.mxu0 %v1028
    %1444 = vmatpush.bf16.msra.mxu0 %v1024
    %1445 = vmatmul.bf16.gmra.mxu0 %v342
    %v1446 = vpop.f32.mrf.mxu0
    %v1447 = vadd.f32 %v1433, %v1446
    %v1448 = vpop.f32.mrf.mxu0
    %v1449 = vadd.f32 %v1435, %v1448
    %1450 = vdwg.mxu0
    %1451 = vmatpush.bf16.msra.mxu0 %v1084
    %1452 = vmatpush.bf16.msra.mxu0 %v1080
    %1453 = vmatpush.bf16.msra.mxu0 %v1076
    %1454 = vmatpush.bf16.msra.mxu0 %v1072
    %1455 = vmatpush.bf16.msra.mxu0 %v1068
    %1456 = vmatpush.bf16.msra.mxu0 %v1064
    %1457 = vmatpush.bf16.msra.mxu0 %v1060
    %1458 = vmatpush.bf16.msra.mxu0 %v1056
    %1459 = vmatmul.bf16.gmra.mxu0 %v343
    %v1460 = vpop.f32.mrf.mxu0
    %v1461 = vadd.f32 %v1447, %v1460
    %v1462 = vpop.f32.mrf.mxu0
    %v1463 = vadd.f32 %v1449, %v1462
    %1464 = vdwg.mxu0
    %1465 = vmatpush.bf16.msra.mxu0 %v1116
    %1466 = vmatpush.bf16.msra.mxu0 %v1112
    %1467 = vmatpush.bf16.msra.mxu0 %v1108
    %1468 = vmatpush.bf16.msra.mxu0 %v1104
    %1469 = vmatpush.bf16.msra.mxu0 %v1100
    %1470 = vmatpush.bf16.msra.mxu0 %v1096
    %1471 = vmatpush.bf16.msra.mxu0 %v1092
    %1472 = vmatpush.bf16.msra.mxu0 %v1088
    %1473 = vmatmul.bf16.gmra.mxu0 %v344
    %v1474 = vpop.f32.mrf.mxu0
    %v1475 = vadd.f32 %v1461, %v1474
    %v1476 = vpop.f32.mrf.mxu0
    %v1477 = vadd.f32 %v1463, %v1476
    %1478 = vdwg.mxu0
    %1479 = vmatpush.bf16.msra.mxu0 %v957
    %1480 = vmatpush.bf16.msra.mxu0 %v953
    %1481 = vmatpush.bf16.msra.mxu0 %v949
    %1482 = vmatpush.bf16.msra.mxu0 %v945
    %1483 = vmatpush.bf16.msra.mxu0 %v941
    %1484 = vmatpush.bf16.msra.mxu0 %v937
    %1485 = vmatpush.bf16.msra.mxu0 %v933
    %1486 = vmatpush.bf16.msra.mxu0 %v929
    %1487 = vmatmul.bf16.gmra.mxu0 %v339
    %v1488 = vpop.f32.mrf.mxu0
    %v1489 = vadd.f32 0.0, %v1488
    %v1490 = vpop.f32.mrf.mxu0
    %v1491 = vadd.f32 0.0, %v1490
    %1492 = vdwg.mxu0
    %1493 = vmatpush.bf16.msra.mxu0 %v989
    %1494 = vmatpush.bf16.msra.mxu0 %v985
    %1495 = vmatpush.bf16.msra.mxu0 %v981
    %1496 = vmatpush.bf16.msra.mxu0 %v977
    %1497 = vmatpush.bf16.msra.mxu0 %v973
    %1498 = vmatpush.bf16.msra.mxu0 %v969
    %1499 = vmatpush.bf16.msra.mxu0 %v965
    %1500 = vmatpush.bf16.msra.mxu0 %v961
    %1501 = vmatmul.bf16.gmra.mxu0 %v340
    %v1502 = vpop.f32.mrf.mxu0
    %v1503 = vadd.f32 %v1489, %v1502
    %v1504 = vpop.f32.mrf.mxu0
    %v1505 = vadd.f32 %v1491, %v1504
    %1506 = vdwg.mxu0
    %1507 = vmatpush.bf16.msra.mxu0 %v1021
    %1508 = vmatpush.bf16.msra.mxu0 %v1017
    %1509 = vmatpush.bf16.msra.mxu0 %v1013
    %1510 = vmatpush.bf16.msra.mxu0 %v1009
    %1511 = vmatpush.bf16.msra.mxu0 %v1005
    %1512 = vmatpush.bf16.msra.mxu0 %v1001
    %1513 = vmatpush.bf16.msra.mxu0 %v997
    %1514 = vmatpush.bf16.msra.mxu0 %v993
    %1515 = vmatmul.bf16.gmra.mxu0 %v341
    %v1516 = vpop.f32.mrf.mxu0
    %v1517 = vadd.f32 %v1503, %v1516
    %v1518 = vpop.f32.mrf.mxu0
    %v1519 = vadd.f32 %v1505, %v1518
    %1520 = vdwg.mxu0
    %1521 = vmatpush.bf16.msra.mxu0 %v1053
    %1522 = vmatpush.bf16.msra.mxu0 %v1049
    %1523 = vmatpush.bf16.msra.mxu0 %v1045
    %1524 = vmatpush.bf16.msra.mxu0 %v1041
    %1525 = vmatpush.bf16.msra.mxu0 %v1037
    %1526 = vmatpush.bf16.msra.mxu0 %v1033
    %1527 = vmatpush.bf16.msra.mxu0 %v1029
    %1528 = vmatpush.bf16.msra.mxu0 %v1025
    %1529 = vmatmul.bf16.gmra.mxu0 %v342
    %v1530 = vpop.f32.mrf.mxu0
    %v1531 = vadd.f32 %v1517, %v1530
    %v1532 = vpop.f32.mrf.mxu0
    %v1533 = vadd.f32 %v1519, %v1532
    %1534 = vdwg.mxu0
    %1535 = vmatpush.bf16.msra.mxu0 %v1085
    %1536 = vmatpush.bf16.msra.mxu0 %v1081
    %1537 = vmatpush.bf16.msra.mxu0 %v1077
    %1538 = vmatpush.bf16.msra.mxu0 %v1073
    %1539 = vmatpush.bf16.msra.mxu0 %v1069
    %1540 = vmatpush.bf16.msra.mxu0 %v1065
    %1541 = vmatpush.bf16.msra.mxu0 %v1061
    %1542 = vmatpush.bf16.msra.mxu0 %v1057
    %1543 = vmatmul.bf16.gmra.mxu0 %v343
    %v1544 = vpop.f32.mrf.mxu0
    %v1545 = vadd.f32 %v1531, %v1544
    %v1546 = vpop.f32.mrf.mxu0
    %v1547 = vadd.f32 %v1533, %v1546
    %1548 = vdwg.mxu0
    %1549 = vmatpush.bf16.msra.mxu0 %v1117
    %1550 = vmatpush.bf16.msra.mxu0 %v1113
    %1551 = vmatpush.bf16.msra.mxu0 %v1109
    %1552 = vmatpush.bf16.msra.mxu0 %v1105
    %1553 = vmatpush.bf16.msra.mxu0 %v1101
    %1554 = vmatpush.bf16.msra.mxu0 %v1097
    %1555 = vmatpush.bf16.msra.mxu0 %v1093
    %1556 = vmatpush.bf16.msra.mxu0 %v1089
    %1557 = vmatmul.bf16.gmra.mxu0 %v344
    %v1558 = vpop.f32.mrf.mxu0
    %v1559 = vadd.f32 %v1545, %v1558
    %v1560 = vpop.f32.mrf.mxu0
    %v1561 = vadd.f32 %v1547, %v1560
    %1562 = vdwg.mxu0
    %1563 = vmatpush.bf16.msra.mxu0 %v958
    %1564 = vmatpush.bf16.msra.mxu0 %v954
    %1565 = vmatpush.bf16.msra.mxu0 %v950
    %1566 = vmatpush.bf16.msra.mxu0 %v946
    %1567 = vmatpush.bf16.msra.mxu0 %v942
    %1568 = vmatpush.bf16.msra.mxu0 %v938
    %1569 = vmatpush.bf16.msra.mxu0 %v934
    %1570 = vmatpush.bf16.msra.mxu0 %v930
    %1571 = vmatmul.bf16.gmra.mxu0 %v339
    %v1572 = vpop.f32.mrf.mxu0
    %v1573 = vadd.f32 0.0, %v1572
    %v1574 = vpop.f32.mrf.mxu0
    %v1575 = vadd.f32 0.0, %v1574
    %1576 = vdwg.mxu0
    %1577 = vmatpush.bf16.msra.mxu0 %v990
    %1578 = vmatpush.bf16.msra.mxu0 %v986
    %1579 = vmatpush.bf16.msra.mxu0 %v982
    %1580 = vmatpush.bf16.msra.mxu0 %v978
    %1581 = vmatpush.bf16.msra.mxu0 %v974
    %1582 = vmatpush.bf16.msra.mxu0 %v970
    %1583 = vmatpush.bf16.msra.mxu0 %v966
    %1584 = vmatpush.bf16.msra.mxu0 %v962
    %1585 = vmatmul.bf16.gmra.mxu0 %v340
    %v1586 = vpop.f32.mrf.mxu0
    %v1587 = vadd.f32 %v1573, %v1586
    %v1588 = vpop.f32.mrf.mxu0
    %v1589 = vadd.f32 %v1575, %v1588
    %1590 = vdwg.mxu0
    %1591 = vmatpush.bf16.msra.mxu0 %v1022
    %1592 = vmatpush.bf16.msra.mxu0 %v1018
    %1593 = vmatpush.bf16.msra.mxu0 %v1014
    %1594 = vmatpush.bf16.msra.mxu0 %v1010
    %1595 = vmatpush.bf16.msra.mxu0 %v1006
    %1596 = vmatpush.bf16.msra.mxu0 %v1002
    %1597 = vmatpush.bf16.msra.mxu0 %v998
    %1598 = vmatpush.bf16.msra.mxu0 %v994
    %1599 = vmatmul.bf16.gmra.mxu0 %v341
    %v1600 = vpop.f32.mrf.mxu0
    %v1601 = vadd.f32 %v1587, %v1600
    %v1602 = vpop.f32.mrf.mxu0
    %v1603 = vadd.f32 %v1589, %v1602
    %1604 = vdwg.mxu0
    %1605 = vmatpush.bf16.msra.mxu0 %v1054
    %1606 = vmatpush.bf16.msra.mxu0 %v1050
    %1607 = vmatpush.bf16.msra.mxu0 %v1046
    %1608 = vmatpush.bf16.msra.mxu0 %v1042
    %1609 = vmatpush.bf16.msra.mxu0 %v1038
    %1610 = vmatpush.bf16.msra.mxu0 %v1034
    %1611 = vmatpush.bf16.msra.mxu0 %v1030
    %1612 = vmatpush.bf16.msra.mxu0 %v1026
    %1613 = vmatmul.bf16.gmra.mxu0 %v342
    %v1614 = vpop.f32.mrf.mxu0
    %v1615 = vadd.f32 %v1601, %v1614
    %v1616 = vpop.f32.mrf.mxu0
    %v1617 = vadd.f32 %v1603, %v1616
    %1618 = vdwg.mxu0
    %1619 = vmatpush.bf16.msra.mxu0 %v1086
    %1620 = vmatpush.bf16.msra.mxu0 %v1082
    %1621 = vmatpush.bf16.msra.mxu0 %v1078
    %1622 = vmatpush.bf16.msra.mxu0 %v1074
    %1623 = vmatpush.bf16.msra.mxu0 %v1070
    %1624 = vmatpush.bf16.msra.mxu0 %v1066
    %1625 = vmatpush.bf16.msra.mxu0 %v1062
    %1626 = vmatpush.bf16.msra.mxu0 %v1058
    %1627 = vmatmul.bf16.gmra.mxu0 %v343
    %v1628 = vpop.f32.mrf.mxu0
    %v1629 = vadd.f32 %v1615, %v1628
    %v1630 = vpop.f32.mrf.mxu0
    %v1631 = vadd.f32 %v1617, %v1630
    %1632 = vdwg.mxu0
    %1633 = vmatpush.bf16.msra.mxu0 %v1118
    %1634 = vmatpush.bf16.msra.mxu0 %v1114
    %1635 = vmatpush.bf16.msra.mxu0 %v1110
    %1636 = vmatpush.bf16.msra.mxu0 %v1106
    %1637 = vmatpush.bf16.msra.mxu0 %v1102
    %1638 = vmatpush.bf16.msra.mxu0 %v1098
    %1639 = vmatpush.bf16.msra.mxu0 %v1094
    %1640 = vmatpush.bf16.msra.mxu0 %v1090
    %1641 = vmatmul.bf16.gmra.mxu0 %v344
    %v1642 = vpop.f32.mrf.mxu0
    %v1643 = vadd.f32 %v1629, %v1642
    %v1644 = vpop.f32.mrf.mxu0
    %v1645 = vadd.f32 %v1631, %v1644
    %1646 = vdwg.mxu0
    %v1647 = vadd.f32 %v115, %v1391
    %v1648 = vadd.f32 %v116, %v1475
    %v1649 = vadd.f32 %v117, %v1559
    %v1650 = vadd.f32 %v118, %v1643
    %v1651 = vadd.f32 %v119, %v1393
    %v1652 = vadd.f32 %v120, %v1477
    %v1653 = vadd.f32 %v121, %v1561
    %v1654 = vadd.f32 %v122, %v1645
    %1655 = vst [vmem:[#allocation2] sm:$0xff] %v1647
    %1656 = vst [vmem:[#allocation2 + $0x8] sm:$0xff] %v1648
    %1657 = vst [vmem:[#allocation2 + $0x10] sm:$0xff] %v1649
    %1658 = vst [vmem:[#allocation2 + $0x18] sm:$0xff] %v1650
    %1659 = vst [vmem:[#allocation2 + $0x20] sm:$0xff] %v1651
    %1660 = vst [vmem:[#allocation2 + $0x28] sm:$0xff] %v1652
    %1661 = vst [vmem:[#allocation2 + $0x30] sm:$0xff] %v1653
    %1662 = vst [vmem:[#allocation2 + $0x38] sm:$0xff] %v1654
    // Predicated region
    $region50: #{tpu_custom_call.1} parent=1 // pred_check
      %p1663 = pneg %p103
    $region51: #{tpu_custom_call.1} parent=1 // pred_check_branch
      %1665 = sbr.rel (%p1663) target = $region53
    $region52: #{tpu_custom_call.1} parent=1 // pred_region
      %s1666 = sld [smem:[#allocation3]]
      %v1667 = vld [vmem:[#allocation2] sm:$0xff]
      %v1668 = vld [vmem:[#allocation2 + $0x8] sm:$0xff]
      %v1669 = vld [vmem:[#allocation2 + $0x10] sm:$0xff]
      %v1670 = vld [vmem:[#allocation2 + $0x18] sm:$0xff]
      %v1671 = vld [vmem:[#allocation2 + $0x20] sm:$0xff]
      %v1672 = vld [vmem:[#allocation2 + $0x28] sm:$0xff]
      %v1673 = vld [vmem:[#allocation2 + $0x30] sm:$0xff]
      %v1674 = vld [vmem:[#allocation2 + $0x38] sm:$0xff]
      %v1675 = vld [vmem:[#allocation10] sm:$0xff]
      %v1676 = vld [vmem:[#allocation10 + $0x8] sm:$0xff]
      %v1677 = vld [vmem:[#allocation10 + $0x10] sm:$0xff]
      %v1678 = vld [vmem:[#allocation10 + $0x18] sm:$0xff]
      %v1679 = vld [vmem:[#allocation10 + $0x20] sm:$0xff]
      %v1680 = vld [vmem:[#allocation10 + $0x28] sm:$0xff]
      %v1681 = vld [vmem:[#allocation10 + $0x30] sm:$0xff]
      %v1682 = vld [vmem:[#allocation10 + $0x38] sm:$0xff]
      %v1683 = vld [vmem:[#allocation10 + $0x40] sm:$0xff]
      %v1684 = vld [vmem:[#allocation10 + $0x48] sm:$0xff]
      %v1685 = vld [vmem:[#allocation10 + $0x50] sm:$0xff]
      %v1686 = vld [vmem:[#allocation10 + $0x58] sm:$0xff]
      %v1687 = vld [vmem:[#allocation10 + $0x60] sm:$0xff]
      %v1688 = vld [vmem:[#allocation10 + $0x68] sm:$0xff]
      %v1689 = vld [vmem:[#allocation10 + $0x70] sm:$0xff]
      %v1690 = vld [vmem:[#allocation10 + $0x78] sm:$0xff]
      %v1691 = vld [vmem:[#allocation10 + $0x80] sm:$0xff]
      %v1692 = vld [vmem:[#allocation10 + $0x88] sm:$0xff]
      %v1693 = vld [vmem:[#allocation10 + $0x90] sm:$0xff]
      %v1694 = vld [vmem:[#allocation10 + $0x98] sm:$0xff]
      %v1695 = vld [vmem:[#allocation10 + $0xa0] sm:$0xff]
      %v1696 = vld [vmem:[#allocation10 + $0xa8] sm:$0xff]
      %v1697 = vld [vmem:[#allocation10 + $0xb0] sm:$0xff]
      %v1698 = vld [vmem:[#allocation10 + $0xb8] sm:$0xff]
      %v1699 = vld [vmem:[#allocation10 + $0xc0] sm:$0xff]
      %v1700 = vld [vmem:[#allocation10 + $0xc8] sm:$0xff]
      %v1701 = vld [vmem:[#allocation10 + $0xd0] sm:$0xff]
      %v1702 = vld [vmem:[#allocation10 + $0xd8] sm:$0xff]
      %v1703 = vld [vmem:[#allocation10 + $0xe0] sm:$0xff]
      %v1704 = vld [vmem:[#allocation10 + $0xe8] sm:$0xff]
      %v1705 = vld [vmem:[#allocation10 + $0xf0] sm:$0xff]
      %v1706 = vld [vmem:[#allocation10 + $0xf8] sm:$0xff]
      %v1707 = vld [vmem:[#allocation10 + $0x100] sm:$0xff]
      %v1708 = vld [vmem:[#allocation10 + $0x108] sm:$0xff]
      %v1709 = vld [vmem:[#allocation10 + $0x110] sm:$0xff]
      %v1710 = vld [vmem:[#allocation10 + $0x118] sm:$0xff]
      %v1711 = vld [vmem:[#allocation10 + $0x120] sm:$0xff]
      %v1712 = vld [vmem:[#allocation10 + $0x128] sm:$0xff]
      %v1713 = vld [vmem:[#allocation10 + $0x130] sm:$0xff]
      %v1714 = vld [vmem:[#allocation10 + $0x138] sm:$0xff]
      %v1715 = vld [vmem:[#allocation10 + $0x140] sm:$0xff]
      %v1716 = vld [vmem:[#allocation10 + $0x148] sm:$0xff]
      %v1717 = vld [vmem:[#allocation10 + $0x150] sm:$0xff]
      %v1718 = vld [vmem:[#allocation10 + $0x158] sm:$0xff]
      %v1719 = vld [vmem:[#allocation10 + $0x160] sm:$0xff]
      %v1720 = vld [vmem:[#allocation10 + $0x168] sm:$0xff]
      %v1721 = vld [vmem:[#allocation10 + $0x170] sm:$0xff]
      %v1722 = vld [vmem:[#allocation10 + $0x178] sm:$0xff]
      %v1723 = vld [vmem:[#allocation10 + $0x180] sm:$0xff]
      %v1724 = vld [vmem:[#allocation10 + $0x188] sm:$0xff]
      %v1725 = vld [vmem:[#allocation10 + $0x190] sm:$0xff]
      %v1726 = vld [vmem:[#allocation10 + $0x198] sm:$0xff]
      %v1727 = vld [vmem:[#allocation10 + $0x1a0] sm:$0xff]
      %v1728 = vld [vmem:[#allocation10 + $0x1a8] sm:$0xff]
      %v1729 = vld [vmem:[#allocation10 + $0x1b0] sm:$0xff]
      %v1730 = vld [vmem:[#allocation10 + $0x1b8] sm:$0xff]
      %v1731 = vld [vmem:[#allocation10 + $0x1c0] sm:$0xff]
      %v1732 = vld [vmem:[#allocation10 + $0x1c8] sm:$0xff]
      %v1733 = vld [vmem:[#allocation10 + $0x1d0] sm:$0xff]
      %v1734 = vld [vmem:[#allocation10 + $0x1d8] sm:$0xff]
      %v1735 = vld [vmem:[#allocation10 + $0x1e0] sm:$0xff]
      %v1736 = vld [vmem:[#allocation10 + $0x1e8] sm:$0xff]
      %v1737 = vld [vmem:[#allocation10 + $0x1f0] sm:$0xff]
      %v1738 = vld [vmem:[#allocation10 + $0x1f8] sm:$0xff]
      %1739 = vmatpush.msra.mxu0 %v1690
      %1740 = vmatpush.msra.mxu0 %v1689
      %1741 = vmatpush.msra.mxu0 %v1688
      %1742 = vmatpush.msra.mxu0 %v1687
      %1743 = vmatpush.msra.mxu0 %v1686
      %1744 = vmatpush.msra.mxu0 %v1685
      %1745 = vmatpush.msra.mxu0 %v1684
      %1746 = vmatpush.msra.mxu0 %v1683
      %1747 = vmatpush.msra.mxu0 %v1682
      %1748 = vmatpush.msra.mxu0 %v1681
      %1749 = vmatpush.msra.mxu0 %v1680
      %1750 = vmatpush.msra.mxu0 %v1679
      %1751 = vmatpush.msra.mxu0 %v1678
      %1752 = vmatpush.msra.mxu0 %v1677
      %1753 = vmatpush.msra.mxu0 %v1676
      %1754 = vmatpush.msra.mxu0 %v1675
      %1755 = vmatmul.f32.gmra.mxu0 %v1667
      %v1756 = vpop.f32.mrf.mxu0
      %v1757 = vadd.f32 0.0, %v1756
      %1758 = vmatmul.f32.gmra.mxu0 %v1671
      %v1759 = vpop.f32.mrf.mxu0
      %v1760 = vadd.f32 0.0, %v1759
      %1761 = vdwg.mxu0
      %1762 = vmatpush.msra.mxu0 %v1706
      %1763 = vmatpush.msra.mxu0 %v1705
      %1764 = vmatpush.msra.mxu0 %v1704
      %1765 = vmatpush.msra.mxu0 %v1703
      %1766 = vmatpush.msra.mxu0 %v1702
      %1767 = vmatpush.msra.mxu0 %v1701
      %1768 = vmatpush.msra.mxu0 %v1700
      %1769 = vmatpush.msra.mxu0 %v1699
      %1770 = vmatpush.msra.mxu0 %v1698
      %1771 = vmatpush.msra.mxu0 %v1697
      %1772 = vmatpush.msra.mxu0 %v1696
      %1773 = vmatpush.msra.mxu0 %v1695
      %1774 = vmatpush.msra.mxu0 %v1694
      %1775 = vmatpush.msra.mxu0 %v1693
      %1776 = vmatpush.msra.mxu0 %v1692
      %1777 = vmatpush.msra.mxu0 %v1691
      %1778 = vmatmul.f32.gmra.mxu0 %v1668
      %v1779 = vpop.f32.mrf.mxu0
      %v1780 = vadd.f32 %v1757, %v1779
      %1781 = vmatmul.f32.gmra.mxu0 %v1672
      %v1782 = vpop.f32.mrf.mxu0
      %v1783 = vadd.f32 %v1760, %v1782
      %1784 = vdwg.mxu0
      %1785 = vmatpush.msra.mxu0 %v1722
      %1786 = vmatpush.msra.mxu0 %v1721
      %1787 = vmatpush.msra.mxu0 %v1720
      %1788 = vmatpush.msra.mxu0 %v1719
      %1789 = vmatpush.msra.mxu0 %v1718
      %1790 = vmatpush.msra.mxu0 %v1717
      %1791 = vmatpush.msra.mxu0 %v1716
      %1792 = vmatpush.msra.mxu0 %v1715
      %1793 = vmatpush.msra.mxu0 %v1714
      %1794 = vmatpush.msra.mxu0 %v1713
      %1795 = vmatpush.msra.mxu0 %v1712
      %1796 = vmatpush.msra.mxu0 %v1711
      %1797 = vmatpush.msra.mxu0 %v1710
      %1798 = vmatpush.msra.mxu0 %v1709
      %1799 = vmatpush.msra.mxu0 %v1708
      %1800 = vmatpush.msra.mxu0 %v1707
      %1801 = vmatmul.f32.gmra.mxu0 %v1669
      %v1802 = vpop.f32.mrf.mxu0
      %v1803 = vadd.f32 %v1780, %v1802
      %1804 = vmatmul.f32.gmra.mxu0 %v1673
      %v1805 = vpop.f32.mrf.mxu0
      %v1806 = vadd.f32 %v1783, %v1805
      %1807 = vdwg.mxu0
      %1808 = vmatpush.msra.mxu0 %v1738
      %1809 = vmatpush.msra.mxu0 %v1737
      %1810 = vmatpush.msra.mxu0 %v1736
      %1811 = vmatpush.msra.mxu0 %v1735
      %1812 = vmatpush.msra.mxu0 %v1734
      %1813 = vmatpush.msra.mxu0 %v1733
      %1814 = vmatpush.msra.mxu0 %v1732
      %1815 = vmatpush.msra.mxu0 %v1731
      %1816 = vmatpush.msra.mxu0 %v1730
      %1817 = vmatpush.msra.mxu0 %v1729
      %1818 = vmatpush.msra.mxu0 %v1728
      %1819 = vmatpush.msra.mxu0 %v1727
      %1820 = vmatpush.msra.mxu0 %v1726
      %1821 = vmatpush.msra.mxu0 %v1725
      %1822 = vmatpush.msra.mxu0 %v1724
      %1823 = vmatpush.msra.mxu0 %v1723
      %1824 = vmatmul.f32.gmra.mxu0 %v1670
      %v1825 = vpop.f32.mrf.mxu0
      %v1826 = vadd.f32 %v1803, %v1825
      %1827 = vmatmul.f32.gmra.mxu0 %v1674
      %v1828 = vpop.f32.mrf.mxu0
      %v1829 = vadd.f32 %v1806, %v1828
      %1830 = vdwg.mxu0
      %v1831 = vmax.f32 %v1826, 0.0
      %v1832 = vmax.f32 %v1829, 0.0
      %v1833 = vld [vmem:[#allocation12] sm:$0xff]
      %v1834 = vld [vmem:[#allocation12 + $0x8] sm:$0xff]
      %v1835 = vld [vmem:[#allocation12 + $0x10] sm:$0xff]
      %v1836 = vld [vmem:[#allocation12 + $0x18] sm:$0xff]
      %v1837 = vld [vmem:[#allocation12 + $0x20] sm:$0xff]
      %v1838 = vld [vmem:[#allocation12 + $0x28] sm:$0xff]
      %v1839 = vld [vmem:[#allocation12 + $0x30] sm:$0xff]
      %v1840 = vld [vmem:[#allocation12 + $0x38] sm:$0xff]
      %v1841 = vld [vmem:[#allocation12 + $0x40] sm:$0xff]
      %v1842 = vld [vmem:[#allocation12 + $0x48] sm:$0xff]
      %v1843 = vld [vmem:[#allocation12 + $0x50] sm:$0xff]
      %v1844 = vld [vmem:[#allocation12 + $0x58] sm:$0xff]
      %v1845 = vld [vmem:[#allocation12 + $0x60] sm:$0xff]
      %v1846 = vld [vmem:[#allocation12 + $0x68] sm:$0xff]
      %v1847 = vld [vmem:[#allocation12 + $0x70] sm:$0xff]
      %v1848 = vld [vmem:[#allocation12 + $0x78] sm:$0xff]
      %v1849 = vld [vmem:[#allocation12 + $0x80] sm:$0xff]
      %v1850 = vld [vmem:[#allocation12 + $0x88] sm:$0xff]
      %v1851 = vld [vmem:[#allocation12 + $0x90] sm:$0xff]
      %v1852 = vld [vmem:[#allocation12 + $0x98] sm:$0xff]
      %v1853 = vld [vmem:[#allocation12 + $0xa0] sm:$0xff]
      %v1854 = vld [vmem:[#allocation12 + $0xa8] sm:$0xff]
      %v1855 = vld [vmem:[#allocation12 + $0xb0] sm:$0xff]
      %v1856 = vld [vmem:[#allocation12 + $0xb8] sm:$0xff]
      %v1857 = vld [vmem:[#allocation12 + $0xc0] sm:$0xff]
      %v1858 = vld [vmem:[#allocation12 + $0xc8] sm:$0xff]
      %v1859 = vld [vmem:[#allocation12 + $0xd0] sm:$0xff]
      %v1860 = vld [vmem:[#allocation12 + $0xd8] sm:$0xff]
      %v1861 = vld [vmem:[#allocation12 + $0xe0] sm:$0xff]
      %v1862 = vld [vmem:[#allocation12 + $0xe8] sm:$0xff]
      %v1863 = vld [vmem:[#allocation12 + $0xf0] sm:$0xff]
      %v1864 = vld [vmem:[#allocation12 + $0xf8] sm:$0xff]
      %v1865 = vld [vmem:[#allocation12 + $0x100] sm:$0xff]
      %v1866 = vld [vmem:[#allocation12 + $0x108] sm:$0xff]
      %v1867 = vld [vmem:[#allocation12 + $0x110] sm:$0xff]
      %v1868 = vld [vmem:[#allocation12 + $0x118] sm:$0xff]
      %v1869 = vld [vmem:[#allocation12 + $0x120] sm:$0xff]
      %v1870 = vld [vmem:[#allocation12 + $0x128] sm:$0xff]
      %v1871 = vld [vmem:[#allocation12 + $0x130] sm:$0xff]
      %v1872 = vld [vmem:[#allocation12 + $0x138] sm:$0xff]
      %v1873 = vld [vmem:[#allocation12 + $0x140] sm:$0xff]
      %v1874 = vld [vmem:[#allocation12 + $0x148] sm:$0xff]
      %v1875 = vld [vmem:[#allocation12 + $0x150] sm:$0xff]
      %v1876 = vld [vmem:[#allocation12 + $0x158] sm:$0xff]
      %v1877 = vld [vmem:[#allocation12 + $0x160] sm:$0xff]
      %v1878 = vld [vmem:[#allocation12 + $0x168] sm:$0xff]
      %v1879 = vld [vmem:[#allocation12 + $0x170] sm:$0xff]
      %v1880 = vld [vmem:[#allocation12 + $0x178] sm:$0xff]
      %v1881 = vld [vmem:[#allocation12 + $0x180] sm:$0xff]
      %v1882 = vld [vmem:[#allocation12 + $0x188] sm:$0xff]
      %v1883 = vld [vmem:[#allocation12 + $0x190] sm:$0xff]
      %v1884 = vld [vmem:[#allocation12 + $0x198] sm:$0xff]
      %v1885 = vld [vmem:[#allocation12 + $0x1a0] sm:$0xff]
      %v1886 = vld [vmem:[#allocation12 + $0x1a8] sm:$0xff]
      %v1887 = vld [vmem:[#allocation12 + $0x1b0] sm:$0xff]
      %v1888 = vld [vmem:[#allocation12 + $0x1b8] sm:$0xff]
      %v1889 = vld [vmem:[#allocation12 + $0x1c0] sm:$0xff]
      %v1890 = vld [vmem:[#allocation12 + $0x1c8] sm:$0xff]
      %v1891 = vld [vmem:[#allocation12 + $0x1d0] sm:$0xff]
      %v1892 = vld [vmem:[#allocation12 + $0x1d8] sm:$0xff]
      %v1893 = vld [vmem:[#allocation12 + $0x1e0] sm:$0xff]
      %v1894 = vld [vmem:[#allocation12 + $0x1e8] sm:$0xff]
      %v1895 = vld [vmem:[#allocation12 + $0x1f0] sm:$0xff]
      %v1896 = vld [vmem:[#allocation12 + $0x1f8] sm:$0xff]
      %1897 = vmatpush.msra.mxu0 %v1893
      %1898 = vmatpush.msra.mxu0 %v1889
      %1899 = vmatpush.msra.mxu0 %v1885
      %1900 = vmatpush.msra.mxu0 %v1881
      %1901 = vmatpush.msra.mxu0 %v1877
      %1902 = vmatpush.msra.mxu0 %v1873
      %1903 = vmatpush.msra.mxu0 %v1869
      %1904 = vmatpush.msra.mxu0 %v1865
      %1905 = vmatpush.msra.mxu0 %v1861
      %1906 = vmatpush.msra.mxu0 %v1857
      %1907 = vmatpush.msra.mxu0 %v1853
      %1908 = vmatpush.msra.mxu0 %v1849
      %1909 = vmatpush.msra.mxu0 %v1845
      %1910 = vmatpush.msra.mxu0 %v1841
      %1911 = vmatpush.msra.mxu0 %v1837
      %1912 = vmatpush.msra.mxu0 %v1833
      %1913 = vmatmul.f32.gmra.mxu0 %v1831
      %v1914 = vpop.f32.mrf.mxu0
      %v1915 = vadd.f32 0.0, %v1914
      %1916 = vmatmul.f32.gmra.mxu0 %v1832
      %v1917 = vpop.f32.mrf.mxu0
      %v1918 = vadd.f32 0.0, %v1917
      %1919 = vdwg.mxu0
      %1920 = vmatpush.msra.mxu0 %v1894
      %1921 = vmatpush.msra.mxu0 %v1890
      %1922 = vmatpush.msra.mxu0 %v1886
      %1923 = vmatpush.msra.mxu0 %v1882
      %1924 = vmatpush.msra.mxu0 %v1878
      %1925 = vmatpush.msra.mxu0 %v1874
      %1926 = vmatpush.msra.mxu0 %v1870
      %1927 = vmatpush.msra.mxu0 %v1866
      %1928 = vmatpush.msra.mxu0 %v1862
      %1929 = vmatpush.msra.mxu0 %v1858
      %1930 = vmatpush.msra.mxu0 %v1854
      %1931 = vmatpush.msra.mxu0 %v1850
      %1932 = vmatpush.msra.mxu0 %v1846
      %1933 = vmatpush.msra.mxu0 %v1842
      %1934 = vmatpush.msra.mxu0 %v1838
      %1935 = vmatpush.msra.mxu0 %v1834
      %1936 = vmatmul.f32.gmra.mxu0 %v1831
      %v1937 = vpop.f32.mrf.mxu0
      %v1938 = vadd.f32 0.0, %v1937
      %1939 = vmatmul.f32.gmra.mxu0 %v1832
      %v1940 = vpop.f32.mrf.mxu0
      %v1941 = vadd.f32 0.0, %v1940
      %1942 = vdwg.mxu0
      %1943 = vmatpush.msra.mxu0 %v1895
      %1944 = vmatpush.msra.mxu0 %v1891
      %1945 = vmatpush.msra.mxu0 %v1887
      %1946 = vmatpush.msra.mxu0 %v1883
      %1947 = vmatpush.msra.mxu0 %v1879
      %1948 = vmatpush.msra.mxu0 %v1875
      %1949 = vmatpush.msra.mxu0 %v1871
      %1950 = vmatpush.msra.mxu0 %v1867
      %1951 = vmatpush.msra.mxu0 %v1863
      %1952 = vmatpush.msra.mxu0 %v1859
      %1953 = vmatpush.msra.mxu0 %v1855
      %1954 = vmatpush.msra.mxu0 %v1851
      %1955 = vmatpush.msra.mxu0 %v1847
      %1956 = vmatpush.msra.mxu0 %v1843
      %1957 = vmatpush.msra.mxu0 %v1839
      %1958 = vmatpush.msra.mxu0 %v1835
      %1959 = vmatmul.f32.gmra.mxu0 %v1831
      %v1960 = vpop.f32.mrf.mxu0
      %v1961 = vadd.f32 0.0, %v1960
      %1962 = vmatmul.f32.gmra.mxu0 %v1832
      %v1963 = vpop.f32.mrf.mxu0
      %v1964 = vadd.f32 0.0, %v1963
      %1965 = vdwg.mxu0
      %1966 = vmatpush.msra.mxu0 %v1896
      %1967 = vmatpush.msra.mxu0 %v1892
      %1968 = vmatpush.msra.mxu0 %v1888
      %1969 = vmatpush.msra.mxu0 %v1884
      %1970 = vmatpush.msra.mxu0 %v1880
      %1971 = vmatpush.msra.mxu0 %v1876
      %1972 = vmatpush.msra.mxu0 %v1872
      %1973 = vmatpush.msra.mxu0 %v1868
      %1974 = vmatpush.msra.mxu0 %v1864
      %1975 = vmatpush.msra.mxu0 %v1860
      %1976 = vmatpush.msra.mxu0 %v1856
      %1977 = vmatpush.msra.mxu0 %v1852
      %1978 = vmatpush.msra.mxu0 %v1848
      %1979 = vmatpush.msra.mxu0 %v1844
      %1980 = vmatpush.msra.mxu0 %v1840
      %1981 = vmatpush.msra.mxu0 %v1836
      %1982 = vmatmul.f32.gmra.mxu0 %v1831
      %v1983 = vpop.f32.mrf.mxu0
      %v1984 = vadd.f32 0.0, %v1983
      %1985 = vmatmul.f32.gmra.mxu0 %v1832
      %v1986 = vpop.f32.mrf.mxu0
      %v1987 = vadd.f32 0.0, %v1986
      %1988 = vdwg.mxu0
      %v1989 = vmax.f32 %v1915, 0.0
      %v1990 = vmax.f32 %v1938, 0.0
      %v1991 = vmax.f32 %v1961, 0.0
      %v1992 = vmax.f32 %v1984, 0.0
      %v1993 = vmax.f32 %v1918, 0.0
      %v1994 = vmax.f32 %v1941, 0.0
      %v1995 = vmax.f32 %v1964, 0.0
      %v1996 = vmax.f32 %v1987, 0.0
      %v1997 = vstv %s1666
      %v1998 = vmul.f32 %v1997, %v1989
      %v1999 = vmul.f32 %v1997, %v1990
      %v2000 = vmul.f32 %v1997, %v1991
      %v2001 = vmul.f32 %v1997, %v1992
      %v2002 = vmul.f32 %v1997, %v1993
      %v2003 = vmul.f32 %v1997, %v1994
      %v2004 = vmul.f32 %v1997, %v1995
      %v2005 = vmul.f32 %v1997, %v1996
      %s2006 = ssub.f32 1.0, %s1666
      %v2007 = vstv %s2006
      %v2008 = vmul.f32 %v2007, %v1667
      %v2009 = vmul.f32 %v2007, %v1668
      %v2010 = vmul.f32 %v2007, %v1669
      %v2011 = vmul.f32 %v2007, %v1670
      %v2012 = vmul.f32 %v2007, %v1671
      %v2013 = vmul.f32 %v2007, %v1672
      %v2014 = vmul.f32 %v2007, %v1673
      %v2015 = vmul.f32 %v2007, %v1674
      %v2016 = vadd.f32 %v1998, %v2008
      %v2017 = vadd.f32 %v1999, %v2009
      %v2018 = vadd.f32 %v2000, %v2010
      %v2019 = vadd.f32 %v2001, %v2011
      %v2020 = vadd.f32 %v2002, %v2012
      %v2021 = vadd.f32 %v2003, %v2013
      %v2022 = vadd.f32 %v2004, %v2014
      %v2023 = vadd.f32 %v2005, %v2015
      %v2024 = vmul.f32 %v2016, %v2016
      %v2025 = vmul.f32 %v2017, %v2017
      %v2026 = vmul.f32 %v2018, %v2018
      %v2027 = vmul.f32 %v2019, %v2019
      %v2028 = vmul.f32 %v2020, %v2020
      %v2029 = vmul.f32 %v2021, %v2021
      %v2030 = vmul.f32 %v2022, %v2022
      %v2031 = vmul.f32 %v2023, %v2023
      %v2032 = vadd.f32 %v2024, %v2025
      %v2033 = vadd.f32 %v2032, %v2026
      %v2034 = vadd.f32 %v2033, %v2027
      %2035 = vadd.xlane.f32.xlu0 %v2034
      %v2036 = vpop.xlane.xlu0 %2035
      %v2037 = vadd.f32 %v2028, %v2029
      %v2038 = vadd.f32 %v2037, %v2030
      %v2039 = vadd.f32 %v2038, %v2031
      %2040 = vadd.xlane.f32.xlu0 %v2039
      %v2041 = vpop.xlane.xlu0 %2040
      %vm2042 = vcmp.gt.f32.partialorder %v2036, 0.0
      %vm2043 = vcmp.gt.f32.partialorder %v2041, 0.0
      %v2044 = vrsqrt.pop %v2036
      %v2045 = vmul.f32 %v2044, %v2036
      %v2046 = vmul.f32 %v2045, %v2044
      %v2047 = vmul.f32 0.5, %v2046
      %v2048 = vsub.f32 1.5, %v2047
      %v2049 = vmul.f32 %v2044, %v2048
      %vm2050 = vweird.f32 %v2036
      %vm2051 = vweird.f32 %v2044
      %vm2052 = vmor %vm2050, %vm2051
      %v2053 = vsel %vm2052, %v2044, %v2049
      %v2054 = vrsqrt.pop %v2041
      %v2055 = vmul.f32 %v2054, %v2041
      %v2056 = vmul.f32 %v2055, %v2054
      %v2057 = vmul.f32 0.5, %v2056
      %v2058 = vsub.f32 1.5, %v2057
      %v2059 = vmul.f32 %v2054, %v2058
      %vm2060 = vweird.f32 %v2041
      %vm2061 = vweird.f32 %v2054
      %vm2062 = vmor %vm2060, %vm2061
      %v2063 = vsel %vm2062, %v2054, %v2059
      %v2064 = vsel %vm2042, %v2053, 0.0
      %v2065 = vsel %vm2043, %v2063, 0.0
      %v2066 = vmul.f32 %v2016, %v2064
      %v2067 = vmul.f32 %v2017, %v2064
      %v2068 = vmul.f32 %v2018, %v2064
      %v2069 = vmul.f32 %v2019, %v2064
      %v2070 = vmul.f32 %v2020, %v2065
      %v2071 = vmul.f32 %v2021, %v2065
      %v2072 = vmul.f32 %v2022, %v2065
      %v2073 = vmul.f32 %v2023, %v2065
      %v2074 = vld [vmem:[#allocation9] sm:$0xff]
      %v2075 = vld [vmem:[#allocation9 + $0x8] sm:$0xff]
      %v2076 = vld [vmem:[#allocation9 + $0x10] sm:$0xff]
      %v2077 = vld [vmem:[#allocation9 + $0x18] sm:$0xff]
      %v2078 = vld [vmem:[#allocation9 + $0x20] sm:$0xff]
      %v2079 = vld [vmem:[#allocation9 + $0x28] sm:$0xff]
      %v2080 = vld [vmem:[#allocation9 + $0x30] sm:$0xff]
      %v2081 = vld [vmem:[#allocation9 + $0x38] sm:$0xff]
      %v2082 = vld [vmem:[#allocation9 + $0x40] sm:$0xff]
      %v2083 = vld [vmem:[#allocation9 + $0x48] sm:$0xff]
      %v2084 = vld [vmem:[#allocation9 + $0x50] sm:$0xff]
      %v2085 = vld [vmem:[#allocation9 + $0x58] sm:$0xff]
      %v2086 = vld [vmem:[#allocation9 + $0x60] sm:$0xff]
      %v2087 = vld [vmem:[#allocation9 + $0x68] sm:$0xff]
      %v2088 = vld [vmem:[#allocation9 + $0x70] sm:$0xff]
      %v2089 = vld [vmem:[#allocation9 + $0x78] sm:$0xff]
      %v2090 = vld [vmem:[#allocation9 + $0x80] sm:$0xff]
      %v2091 = vld [vmem:[#allocation9 + $0x88] sm:$0xff]
      %v2092 = vld [vmem:[#allocation9 + $0x90] sm:$0xff]
      %v2093 = vld [vmem:[#allocation9 + $0x98] sm:$0xff]
      %v2094 = vld [vmem:[#allocation9 + $0xa0] sm:$0xff]
      %v2095 = vld [vmem:[#allocation9 + $0xa8] sm:$0xff]
      %v2096 = vld [vmem:[#allocation9 + $0xb0] sm:$0xff]
      %v2097 = vld [vmem:[#allocation9 + $0xb8] sm:$0xff]
      %v2098 = vld [vmem:[#allocation9 + $0xc0] sm:$0xff]
      %v2099 = vld [vmem:[#allocation9 + $0xc8] sm:$0xff]
      %v2100 = vld [vmem:[#allocation9 + $0xd0] sm:$0xff]
      %v2101 = vld [vmem:[#allocation9 + $0xd8] sm:$0xff]
      %v2102 = vld [vmem:[#allocation9 + $0xe0] sm:$0xff]
      %v2103 = vld [vmem:[#allocation9 + $0xe8] sm:$0xff]
      %v2104 = vld [vmem:[#allocation9 + $0xf0] sm:$0xff]
      %v2105 = vld [vmem:[#allocation9 + $0xf8] sm:$0xff]
      %v2106 = vld [vmem:[#allocation9 + $0x100] sm:$0xff]
      %v2107 = vld [vmem:[#allocation9 + $0x108] sm:$0xff]
      %v2108 = vld [vmem:[#allocation9 + $0x110] sm:$0xff]
      %v2109 = vld [vmem:[#allocation9 + $0x118] sm:$0xff]
      %v2110 = vld [vmem:[#allocation9 + $0x120] sm:$0xff]
      %v2111 = vld [vmem:[#allocation9 + $0x128] sm:$0xff]
      %v2112 = vld [vmem:[#allocation9 + $0x130] sm:$0xff]
      %v2113 = vld [vmem:[#allocation9 + $0x138] sm:$0xff]
      %v2114 = vld [vmem:[#allocation9 + $0x140] sm:$0xff]
      %v2115 = vld [vmem:[#allocation9 + $0x148] sm:$0xff]
      %v2116 = vld [vmem:[#allocation9 + $0x150] sm:$0xff]
      %v2117 = vld [vmem:[#allocation9 + $0x158] sm:$0xff]
      %v2118 = vld [vmem:[#allocation9 + $0x160] sm:$0xff]
      %v2119 = vld [vmem:[#allocation9 + $0x168] sm:$0xff]
      %v2120 = vld [vmem:[#allocation9 + $0x170] sm:$0xff]
      %v2121 = vld [vmem:[#allocation9 + $0x178] sm:$0xff]
      %v2122 = vld [vmem:[#allocation9 + $0x180] sm:$0xff]
      %v2123 = vld [vmem:[#allocation9 + $0x188] sm:$0xff]
      %v2124 = vld [vmem:[#allocation9 + $0x190] sm:$0xff]
      %v2125 = vld [vmem:[#allocation9 + $0x198] sm:$0xff]
      %v2126 = vld [vmem:[#allocation9 + $0x1a0] sm:$0xff]
      %v2127 = vld [vmem:[#allocation9 + $0x1a8] sm:$0xff]
      %v2128 = vld [vmem:[#allocation9 + $0x1b0] sm:$0xff]
      %v2129 = vld [vmem:[#allocation9 + $0x1b8] sm:$0xff]
      %v2130 = vld [vmem:[#allocation9 + $0x1c0] sm:$0xff]
      %v2131 = vld [vmem:[#allocation9 + $0x1c8] sm:$0xff]
      %v2132 = vld [vmem:[#allocation9 + $0x1d0] sm:$0xff]
      %v2133 = vld [vmem:[#allocation9 + $0x1d8] sm:$0xff]
      %v2134 = vld [vmem:[#allocation9 + $0x1e0] sm:$0xff]
      %v2135 = vld [vmem:[#allocation9 + $0x1e8] sm:$0xff]
      %v2136 = vld [vmem:[#allocation9 + $0x1f0] sm:$0xff]
      %v2137 = vld [vmem:[#allocation9 + $0x1f8] sm:$0xff]
      %2138 = vmatpush.msra.mxu0 %v2089
      %2139 = vmatpush.msra.mxu0 %v2088
      %2140 = vmatpush.msra.mxu0 %v2087
      %2141 = vmatpush.msra.mxu0 %v2086
      %2142 = vmatpush.msra.mxu0 %v2085
      %2143 = vmatpush.msra.mxu0 %v2084
      %2144 = vmatpush.msra.mxu0 %v2083
      %2145 = vmatpush.msra.mxu0 %v2082
      %2146 = vmatpush.msra.mxu0 %v2081
      %2147 = vmatpush.msra.mxu0 %v2080
      %2148 = vmatpush.msra.mxu0 %v2079
      %2149 = vmatpush.msra.mxu0 %v2078
      %2150 = vmatpush.msra.mxu0 %v2077
      %2151 = vmatpush.msra.mxu0 %v2076
      %2152 = vmatpush.msra.mxu0 %v2075
      %2153 = vmatpush.msra.mxu0 %v2074
      %2154 = vmatmul.f32.gmra.mxu0 %v2066
      %v2155 = vpop.f32.mrf.mxu0
      %v2156 = vadd.f32 0.0, %v2155
      %2157 = vmatmul.f32.gmra.mxu0 %v2070
      %v2158 = vpop.f32.mrf.mxu0
      %v2159 = vadd.f32 0.0, %v2158
      %2160 = vdwg.mxu0
      %2161 = vmatpush.msra.mxu0 %v2105
      %2162 = vmatpush.msra.mxu0 %v2104
      %2163 = vmatpush.msra.mxu0 %v2103
      %2164 = vmatpush.msra.mxu0 %v2102
      %2165 = vmatpush.msra.mxu0 %v2101
      %2166 = vmatpush.msra.mxu0 %v2100
      %2167 = vmatpush.msra.mxu0 %v2099
      %2168 = vmatpush.msra.mxu0 %v2098
      %2169 = vmatpush.msra.mxu0 %v2097
      %2170 = vmatpush.msra.mxu0 %v2096
      %2171 = vmatpush.msra.mxu0 %v2095
      %2172 = vmatpush.msra.mxu0 %v2094
      %2173 = vmatpush.msra.mxu0 %v2093
      %2174 = vmatpush.msra.mxu0 %v2092
      %2175 = vmatpush.msra.mxu0 %v2091
      %2176 = vmatpush.msra.mxu0 %v2090
      %2177 = vmatmul.f32.gmra.mxu0 %v2067
      %v2178 = vpop.f32.mrf.mxu0
      %v2179 = vadd.f32 %v2156, %v2178
      %2180 = vmatmul.f32.gmra.mxu0 %v2071
      %v2181 = vpop.f32.mrf.mxu0
      %v2182 = vadd.f32 %v2159, %v2181
      %2183 = vdwg.mxu0
      %2184 = vmatpush.msra.mxu0 %v2121
      %2185 = vmatpush.msra.mxu0 %v2120
      %2186 = vmatpush.msra.mxu0 %v2119
      %2187 = vmatpush.msra.mxu0 %v2118
      %2188 = vmatpush.msra.mxu0 %v2117
      %2189 = vmatpush.msra.mxu0 %v2116
      %2190 = vmatpush.msra.mxu0 %v2115
      %2191 = vmatpush.msra.mxu0 %v2114
      %2192 = vmatpush.msra.mxu0 %v2113
      %2193 = vmatpush.msra.mxu0 %v2112
      %2194 = vmatpush.msra.mxu0 %v2111
      %2195 = vmatpush.msra.mxu0 %v2110
      %2196 = vmatpush.msra.mxu0 %v2109
      %2197 = vmatpush.msra.mxu0 %v2108
      %2198 = vmatpush.msra.mxu0 %v2107
      %2199 = vmatpush.msra.mxu0 %v2106
      %2200 = vmatmul.f32.gmra.mxu0 %v2068
      %v2201 = vpop.f32.mrf.mxu0
      %v2202 = vadd.f32 %v2179, %v2201
      %2203 = vmatmul.f32.gmra.mxu0 %v2072
      %v2204 = vpop.f32.mrf.mxu0
      %v2205 = vadd.f32 %v2182, %v2204
      %2206 = vdwg.mxu0
      %2207 = vmatpush.msra.mxu0 %v2137
      %2208 = vmatpush.msra.mxu0 %v2136
      %2209 = vmatpush.msra.mxu0 %v2135
      %2210 = vmatpush.msra.mxu0 %v2134
      %2211 = vmatpush.msra.mxu0 %v2133
      %2212 = vmatpush.msra.mxu0 %v2132
      %2213 = vmatpush.msra.mxu0 %v2131
      %2214 = vmatpush.msra.mxu0 %v2130
      %2215 = vmatpush.msra.mxu0 %v2129
      %2216 = vmatpush.msra.mxu0 %v2128
      %2217 = vmatpush.msra.mxu0 %v2127
      %2218 = vmatpush.msra.mxu0 %v2126
      %2219 = vmatpush.msra.mxu0 %v2125
      %2220 = vmatpush.msra.mxu0 %v2124
      %2221 = vmatpush.msra.mxu0 %v2123
      %2222 = vmatpush.msra.mxu0 %v2122
      %2223 = vmatmul.f32.gmra.mxu0 %v2069
      %v2224 = vpop.f32.mrf.mxu0
      %v2225 = vadd.f32 %v2202, %v2224
      %2226 = vmatmul.f32.gmra.mxu0 %v2073
      %v2227 = vpop.f32.mrf.mxu0
      %v2228 = vadd.f32 %v2205, %v2227
      %2229 = vdwg.mxu0
      %2230 = vst [vmem:[#allocation13] sm:$0xff] %v2225
      %2231 = vst [vmem:[#allocation13 + $0x8] sm:$0xff] %v2228
    $region53: #{tpu_custom_call.1} parent=1 // pred_fallthru
      _
    // Predicated region
    $region54: #{tpu_custom_call.1} parent=1 // pred_check
      _
    $region55: #{tpu_custom_call.1} parent=1 // pred_check_branch
      %2233 = sbr.rel (0) target = $region57
    $region56: #{tpu_custom_call.1} parent=1 // pred_region
      %2235 = vsyncadd [#allocation6], 0
      %s2236 = sshll.u32 [#allocation13], 4
      %s2237 = int_to_ptr.vmem [resolvable:$true] %s2236
      %s2238 = sshll.u32 %s6, 4
      %s2239 = int_to_ptr.hbm [resolvable:$true] %s2238
      %2244 = dma.vmem_to_hbm [thread:$0]  %s2237, 256, %s2239, [#allocation6], 128, 128, 8
    $region57: #{tpu_custom_call.1} parent=1 // pred_fallthru
      _
    // Predicated region
    $region58: #{tpu_custom_call.1} parent=1 // pred_check
      _
    $region59: #{tpu_custom_call.1} parent=1 // pred_check_branch
      %2246 = sbr.rel (0) target = $region61
    $region60: #{tpu_custom_call.1} parent=1 // pred_region
      %2248 = dma.done [#allocation6], 256
    $region61: #{tpu_custom_call.1} parent=1 // pred_fallthru
      _
    %2249 = vsyncpa [#allocation5], 1
    %2250 = vsyncpa [#allocation8], 1
    %2251 = vsyncpa [#allocation11], 1
    %2252 = vsyncpa [#allocation6], 1

</llo_original>
